<compile_context>
chip_gen: v5e
topology: v5e:2x2
jax: 0.10.0
libtpu: 0.0.40
codegen_flags: <defaults>
</compile_context>

<pallas_src>
import functools
import math

import jax
import jax.numpy as jnp
from jax.experimental import pallas as pl
from jax.experimental.pallas import tpu as pltpu

LN_EPS = 1e-5                    # nn.LayerNorm default
_LANE = 128
_SUBLANE = 8
_TARGET_STEP_BYTES = 8 << 20     # ~8 MiB of streamed (x + out) per grid step
_VMEM_HEADROOM = 3 << 20
_SINGLE_BUF_MIN_BYTES = 1 << 20  # single-buffer grid-constant operands above this


# ----------------------------- device / VMEM helpers -------------------------


@functools.lru_cache(maxsize=None)
def _device_kind():
    try:
        return jax.devices()[0].device_kind.lower()
    except Exception:
        return ""


def _is_pre_v6():
    # v5e/v5p and older: no bf16 VALU, slower f32 MXU path.
    return any(t in _device_kind() for t in ("v2", "v3", "v4", "v5"))


def _has_bf16_valu():
    kind = _device_kind()
    return bool(kind) and not _is_pre_v6()


def _vmem_limit_bytes():
    try:
        cap = int(pltpu.get_tpu_info().vmem_capacity_bytes)
    except Exception:
        cap = 64 << 20           # conservative fallback (v7x per-core VMEM)
    # ~3/4 of physical per-core VMEM: ~96 MiB on v5e/v6e (128 MiB), ~48 MiB on v7x.
    return max(8 << 20, min((cap * 3) // 4, 112 << 20))


def _round_up(x, m):
    return -(-x // m) * m


def _cdiv(a, b):
    return -(-a // b)


# ----------------------------- spec / tiling helpers --------------------------


def _buf_factor(nbytes):
    # Large grid-constant operands are single-buffered (see _const_spec).
    return 1 if (nbytes >= _SINGLE_BUF_MIN_BYTES and hasattr(pl, "Buffered")) else 2


def _const_spec(shape, nbytes):
    """BlockSpec for a grid-constant operand.

    Large constants are single-buffered (pipeline_mode=pl.Buffered(1)) so they don't
    eat 2x VMEM; small ones keep the default (the pipeline skips re-fetching an
    unchanged block index either way, so there is nothing to gain below ~1 MiB).
    """
    index_map = lambda *_: (0,) * len(shape)
    if nbytes >= _SINGLE_BUF_MIN_BYTES and hasattr(pl, "Buffered"):
        return pl.BlockSpec(shape, index_map, pipeline_mode=pl.Buffered(1))
    return pl.BlockSpec(shape, index_map)


def _pick_row_tile(n_units, per_unit_vmem, per_unit_hbm, resident_bytes, vmem_limit):
    """Row tile (in row-units) targeting ~_TARGET_STEP_BYTES of streamed HBM per grid
    step, clamped by the VMEM budget, then shaped for megacore (even, >=4 steps when
    there is enough work so each v7x TensorCore gets >=2 steps)."""
    if n_units <= _SUBLANE:
        return n_units                       # single block == full (possibly ragged) dim
    budget = max(vmem_limit - resident_bytes - _VMEM_HEADROOM, 1 << 20)
    max_by_vmem = max(budget // max(per_unit_vmem, 1), _SUBLANE)
    target = max(_TARGET_STEP_BYTES // max(per_unit_hbm, 1), _SUBLANE)
    tile = max(_SUBLANE, min(max_by_vmem, target, n_units))

    steps = _cdiv(n_units, tile)
    if n_units >= 4 * _SUBLANE:
        steps = max(steps, 4)
    elif n_units >= 2 * _SUBLANE:
        steps = max(steps, 2)
    if steps > 1 and steps % 2:
        steps += 1                           # approx-even split across 2 TCs
    tile = _round_up(_cdiv(n_units, steps), _SUBLANE)
    tile = min(tile, max(_SUBLANE, (max_by_vmem // _SUBLANE) * _SUBLANE))
    return max(_SUBLANE, tile)


# ----------------------------- epilogue helpers -------------------------------


def _ln_relu_rowwise(y, gamma, beta, out_dtype, bf16_tail):
    """LayerNorm over the last axis + ReLU. y is f32, post-bias.

    Centered two-pass variance (same big-op count as E[y^2]-mean^2, no cancellation).
    """
    mean = jnp.mean(y, axis=-1, keepdims=True)
    d = y - mean
    var = jnp.mean(d * d, axis=-1, keepdims=True)
    yn = d * jax.lax.rsqrt(var + LN_EPS)
    if bf16_tail:
        # v6e/v7x only, and only when the output dtype is bf16 anyway: packed bf16
        # VALU for the affine + ReLU tail; normalization math stays f32.
        yn = yn.astype(jnp.bfloat16)
        out = jnp.maximum(yn * gamma.astype(jnp.bfloat16) + beta.astype(jnp.bfloat16), 0)
        return out.astype(out_dtype)
    return jnp.maximum(yn * gamma + beta, 0.0).astype(out_dtype)


def _ln_relu_packed(y, gamma, beta, r, s, out_dtype, bf16_tail):
    """Per-pixel LayerNorm for pixel-packed rows.

    y: (TM, k*C_out) f32; r: (k*C_out, k) segment-mean reduce; s: (k, k*C_out)
    segment broadcast. Reductions route through the MXU (tiny matmuls), not the XLU.
    """
    mu = jnp.dot(y, r, preferred_element_type=jnp.float32)          # (TM, k)
    d = y - jnp.dot(mu, s, preferred_element_type=jnp.float32)
    var = jnp.dot(d * d, r, preferred_element_type=jnp.float32)     # (TM, k)
    inv = jax.lax.rsqrt(var + LN_EPS)
    yn = d * jnp.dot(inv, s, preferred_element_type=jnp.float32)
    if bf16_tail:
        yn = yn.astype(jnp.bfloat16)
        out = jnp.maximum(yn * gamma.astype(jnp.bfloat16) + beta.astype(jnp.bfloat16), 0)
        return out.astype(out_dtype)
    return jnp.maximum(yn * gamma + beta, 0.0).astype(out_dtype)


# ----------------------------- kernels ----------------------------------------
# params ref layout (f32): row 0 = bias, row 1 = gamma, row 2 = beta, rows 3..7 = 0.
# Ragged last row-block: garbage rows only ever affect themselves (LN is row-wise)
# and their stores are masked — see header invariant.


def _plain_kernel(x_ref, w_ref, p_ref, o_ref, *, apply_ln_act, bf16_tail):
    y = jnp.dot(x_ref[...], w_ref[...], preferred_element_type=jnp.float32)
    y = y + p_ref[0:1, :]
    if apply_ln_act:
        y = _ln_relu_rowwise(y, p_ref[1:2, :], p_ref[2:3, :], o_ref.dtype, bf16_tail)
    o_ref[...] = y.astype(o_ref.dtype)


def _plain_ktiled_kernel(x_ref, w_ref, p_ref, o_ref, acc_ref, *, apply_ln_act,
                         bf16_tail):
    # grid = (M_steps, K_steps); K is the reduction axis (last, "arbitrary").
    kk = pl.program_id(1)

    @pl.when(kk == 0)
    def _():
        acc_ref[...] = jnp.zeros_like(acc_ref)

    acc_ref[...] += jnp.dot(x_ref[...], w_ref[...], preferred_element_type=jnp.float32)

    @pl.when(kk == pl.num_programs(1) - 1)
    def _():
        y = acc_ref[...] + p_ref[0:1, :]
        if apply_ln_act:
            y = _ln_relu_rowwise(y, p_ref[1:2, :], p_ref[2:3, :], o_ref.dtype,
                                 bf16_tail)
        o_ref[...] = y.astype(o_ref.dtype)


def _packed_kernel(x_ref, w_ref, p_ref, r_ref, s_ref, o_ref, *, apply_ln_act,
                   bf16_tail):
    # Pixel-packed, lane-dense formulation (k pixels folded into the lane dim):
    #   x_ref: (TM, k*C_in), w_ref: (k*C_in, k*C_out) block-diagonal conv weight.
    y = jnp.dot(x_ref[...], w_ref[...], preferred_element_type=jnp.float32)
    y = y + p_ref[0:1, :]
    if apply_ln_act:
        y = _ln_relu_packed(y, p_ref[1:2, :], p_ref[2:3, :], r_ref[...], s_ref[...],
                            o_ref.dtype, bf16_tail)
    o_ref[...] = y.astype(o_ref.dtype)


# ----------------------------- wrapper -----------------------------------------


def conv2d_forward(x, weight, bias, ln_gamma, ln_beta, *, activation=True,
                   _force_ktile=False):
    """Forward of the STMAN `conv2d` module.

    x:        (B, H, W, C_in)   NHWC
    weight:   (C_in, C_out)     (torch Conv2d weight [C_out, C_in, 1, 1] transposed)
    bias:     (C_out,)
    ln_gamma, ln_beta: (C_out,)  LayerNorm affine params (used iff activation)
    activation=True  -> conv + bias + LayerNorm + ReLU
    activation=False -> conv + bias only (module with activation=None)
    Returns (B, H, W, C_out), same dtype as x.
    """
    B, H, W, C_in = x.shape
    C_out = weight.shape[1]
    rows = B * H * W
    out_dtype = x.dtype
    x_isz = jnp.dtype(x.dtype).itemsize
    o_isz = jnp.dtype(out_dtype).itemsize
    w_isz = jnp.dtype(weight.dtype).itemsize

    vmem_limit = _vmem_limit_bytes()
    bf16_tail = bool(activation) and out_dtype == jnp.bfloat16 and _has_bf16_valu()

    b32 = bias.astype(jnp.float32)
    g32 = ln_gamma.astype(jnp.float32)
    be32 = ln_beta.astype(jnp.float32)

    # ---- pixel-packing decision: fold k consecutive pixels into the lane dim so
    # every DMA, matmul and store is lane-dense whenever channels are not a multiple
    # of 128 (covers e.g. 4->32 and 256->64).
    k_in = _LANE // math.gcd(C_in, _LANE)
    k_out = _LANE // math.gcd(C_out, _LANE)
    k = (k_in * k_out) // math.gcd(k_in, k_out)
    kci, kco = k * C_in, k * C_out
    w_bd_bytes = kci * kco * w_isz
    use_packed = (k > 1 and kci <= 2048 and kco <= 4096
                  and w_bd_bytes <= (8 << 20) and not _force_ktile)
    if use_packed and w_isz >= 4 and _is_pre_v6():
        # v5e + f32: the block-diagonal matmul inflates MXU work by k; keep the kernel
        # on the HBM roofline (v5e f32 roofline ~60 flop/B) or fall back to plain.
        intensity = 2.0 * k * C_in * C_out / ((C_in + C_out) * max(x_isz, w_isz))
        if intensity > 30.0:
            use_packed = False

    # ================= pixel-packed, lane-dense path =================
    if use_packed:
        n_units = _cdiv(rows, k)
        pad_rows = n_units * k - rows

        w_bd = jnp.kron(jnp.eye(k, dtype=weight.dtype), weight)              # (kci,kco)
        red = jnp.kron(jnp.eye(k, dtype=jnp.float32),
                       jnp.full((C_out, 1), 1.0 / C_out, jnp.float32))        # (kco,k)
        bcast = jnp.kron(jnp.eye(k, dtype=jnp.float32),
                         jnp.ones((1, C_out), jnp.float32))                   # (k,kco)
        params = (jnp.zeros((8, kco), jnp.float32)
                  .at[0].set(jnp.tile(b32, k))
                  .at[1].set(jnp.tile(g32, k))
                  .at[2].set(jnp.tile(be32, k)))

        x2d = x.reshape(rows, C_in)
        if pad_rows:
            # Only to the next multiple of k (needed for the packed reshape); grid
            # raggedness is handled by Pallas' masked last block, not by padding.
            x2d = jnp.pad(x2d, ((0, pad_rows), (0, 0)))
        xp = x2d.reshape(n_units, kci)                                        # lane-dense

        red_vmem = kco * _LANE * 4
        bcast_vmem = _round_up(k, _SUBLANE) * kco * 4
        p_vmem = 8 * kco * 4
        resident = (w_bd_bytes * _buf_factor(w_bd_bytes)
                    + red_vmem * _buf_factor(red_vmem)
                    + bcast_vmem * _buf_factor(bcast_vmem)
                    + p_vmem * _buf_factor(p_vmem))
        per_unit_vmem = 2 * kci * x_isz + 2 * kco * o_isz      # 2x: double-buffered
        per_unit_hbm = kci * x_isz + kco * o_isz
        tile = _pick_row_tile(n_units, per_unit_vmem, per_unit_hbm, resident,
                              vmem_limit)
        grid = _cdiv(n_units, tile)

        kernel = functools.partial(_packed_kernel, apply_ln_act=bool(activation),
                                   bf16_tail=bf16_tail)
        out = pl.pallas_call(
            kernel,
            out_shape=jax.ShapeDtypeStruct((n_units, kco), out_dtype),
            grid_spec=pltpu.PrefetchScalarGridSpec(
                num_scalar_prefetch=0,
                grid=(grid,),
                in_specs=[
                    pl.BlockSpec((tile, kci), lambda i: (i, 0)),
                    _const_spec((kci, kco), w_bd_bytes),
                    _const_spec((8, kco), p_vmem),
                    _const_spec((kco, k), red_vmem),
                    _const_spec((k, kco), bcast_vmem),
                ],
                out_specs=pl.BlockSpec((tile, kco), lambda i: (i, 0)),
            ),
            compiler_params=pltpu.CompilerParams(
                dimension_semantics=("parallel",),
                vmem_limit_bytes=vmem_limit),
        )(xp, w_bd, params, red, bcast)

        out = out.reshape(n_units * k, C_out)
        if pad_rows:
            out = out[:rows]
        return out.reshape(B, H, W, C_out)

    # ================= plain per-pixel matmul paths =================
    x2d = x.reshape(rows, C_in)
    cin_v = _round_up(C_in, _LANE)
    cout_v = _round_up(C_out, _LANE)
    w_bytes = C_in * C_out * w_isz
    p_vmem = 8 * cout_v * 4
    params = (jnp.zeros((8, C_out), jnp.float32)
              .at[0].set(b32).at[1].set(g32).at[2].set(be32))

    need_ktile = ((w_bytes > vmem_limit // 4 or _force_ktile)
                  and C_in % _LANE == 0 and C_in > _LANE)

    if not need_ktile:
        w_vmem = _round_up(C_in, _SUBLANE) * cout_v * w_isz
        resident = w_vmem * _buf_factor(w_vmem) + p_vmem * _buf_factor(p_vmem)
        per_unit_vmem = 2 * cin_v * x_isz + 2 * cout_v * o_isz
        per_unit_hbm = C_in * x_isz + C_out * o_isz
        tile = _pick_row_tile(rows, per_unit_vmem, per_unit_hbm, resident, vmem_limit)
        grid = _cdiv(rows, tile)

        kernel = functools.partial(_plain_kernel, apply_ln_act=bool(activation),
                                   bf16_tail=bf16_tail)
        out = pl.pallas_call(
            kernel,
            out_shape=jax.ShapeDtypeStruct((rows, C_out), out_dtype),
            grid_spec=pltpu.PrefetchScalarGridSpec(
                num_scalar_prefetch=0,
                grid=(grid,),
                in_specs=[
                    pl.BlockSpec((tile, C_in), lambda i: (i, 0)),
                    _const_spec((C_in, C_out), w_vmem),
                    _const_spec((8, C_out), p_vmem),
                ],
                out_specs=pl.BlockSpec((tile, C_out), lambda i: (i, 0)),
            ),
            compiler_params=pltpu.CompilerParams(
                dimension_semantics=("parallel",),
                vmem_limit_bytes=vmem_limit),
        )(x2d, weight, params)
        return out.reshape(B, H, W, C_out)

    # K-tiled path (huge weights / v7x 64 MiB VMEM): stream the weight along C_in with
    # a f32 VMEM accumulator; bias/LN/ReLU epilogue at the last K step.
    if _force_ktile:
        tk = _LANE
    else:
        tk = _LANE
        for cand in (1024, 512, 256, 128):
            if C_in % cand == 0 and 2 * cand * cout_v * w_isz <= max(vmem_limit // 4,
                                                                     2 << 20):
                tk = cand
                break
    grid_k = C_in // tk

    wblk_vmem = 2 * tk * cout_v * w_isz                 # streamed, double-buffered
    resident = wblk_vmem + p_vmem * _buf_factor(p_vmem)
    per_unit_vmem = 2 * tk * x_isz + 2 * cout_v * o_isz + cout_v * 4   # + f32 acc
    per_unit_hbm = tk * x_isz + C_out * o_isz
    tile = _pick_row_tile(rows, per_unit_vmem, per_unit_hbm, resident, vmem_limit)
    grid_m = _cdiv(rows, tile)

    kernel = functools.partial(_plain_ktiled_kernel, apply_ln_act=bool(activation),
                               bf16_tail=bf16_tail)
    out = pl.pallas_call(
        kernel,
        out_shape=jax.ShapeDtypeStruct((rows, C_out), out_dtype),
        grid_spec=pltpu.PrefetchScalarGridSpec(
            num_scalar_prefetch=0,
            grid=(grid_m, grid_k),
            in_specs=[
                pl.BlockSpec((tile, tk), lambda i, kk: (i, kk)),
                pl.BlockSpec((tk, C_out), lambda i, kk: (kk, 0)),
                _const_spec((8, C_out), p_vmem),
            ],
            out_specs=pl.BlockSpec((tile, C_out), lambda i, kk: (i, 0)),
            scratch_shapes=[pltpu.VMEM((tile, C_out), jnp.float32)],
        ),
        compiler_params=pltpu.CompilerParams(
            dimension_semantics=("parallel", "arbitrary"),
            vmem_limit_bytes=vmem_limit),
    )(x2d, weight, params)
    return out.reshape(B, H, W, C_out)


# ----------------------------- reference & test --------------------------------


def _reference(x, weight, bias, ln_gamma, ln_beta, activation=True):
    y = jnp.einsum("bhwc,cd->bhwd", x.astype(jnp.float32),
                   weight.astype(jnp.float32)) + bias.astype(jnp.float32)
    if activation:
        mean = jnp.mean(y, axis=-1, keepdims=True)
        var = jnp.mean((y - mean) ** 2, axis=-1, keepdims=True)
        y = (y - mean) / jnp.sqrt(var + LN_EPS)
        y = y * ln_gamma.astype(jnp.float32) + ln_beta.astype(jnp.float32)
        y = jnp.maximum(y, 0.0)
    return y.astype(x.dtype)


if __name__ == "__main__":
    key = jax.random.PRNGKey(0)
    kx, kw, kb, kx2, kw2, kb2, kx3, kw3, kb3 = jax.random.split(key, 9)

    # --- small-channel shapes (pixel-packed lane-dense path on v6e/v7x) ----------
    B, H, W, C_in, C_out = 2, 16, 16, 4, 32
    x = jax.random.normal(kx, (B, H, W, C_in), dtype=jnp.float32)
    bound = 1.0 / math.sqrt(C_in)
    w = jax.random.uniform(kw, (C_in, C_out), jnp.float32, -bound, bound)
    b = jax.random.uniform(kb, (C_out,), jnp.float32, -bound, bound)
    g = jnp.ones((C_out,), jnp.float32)
    be = jnp.zeros((C_out,), jnp.float32)

    out = jax.block_until_ready(conv2d_forward(x, w, b, g, be, activation=True))
    ref = _reference(x, w, b, g, be, activation=True)
    assert out.shape == (B, H, W, C_out)
    assert jnp.allclose(out, ref, atol=1e-4, rtol=1e-4)

    # activation=None path of the module: conv + bias only (no LN / ReLU).
    out_na = jax.block_until_ready(conv2d_forward(x, w, b, g, be, activation=False))
    ref_na = _reference(x, w, b, g, be, activation=False)
    assert jnp.allclose(out_na, ref_na, atol=1e-4, rtol=1e-4)

    # bf16 operands: halved HBM traffic, f32 accumulation / LN, bf16 VALU tail on v6e+.
    out_bf = jax.block_until_ready(
        conv2d_forward(x.astype(jnp.bfloat16), w.astype(jnp.bfloat16), b, g, be,
                       activation=True))
    assert out_bf.shape == (B, H, W, C_out)
    assert bool(jnp.all(jnp.isfinite(out_bf.astype(jnp.float32))))

    # --- wide-channel (plain matmul) path, ragged row count, no padding ----------
    B2, H2, W2, C2i, C2o = 2, 7, 5, 128, 128
    x2 = jax.random.normal(kx2, (B2, H2, W2, C2i), dtype=jnp.float32)
    bound2 = 1.0 / math.sqrt(C2i)
    w2 = jax.random.uniform(kw2, (C2i, C2o), jnp.float32, -bound2, bound2)
    b2 = jax.random.uniform(kb2, (C2o,), jnp.float32, -bound2, bound2)
    g2 = jnp.ones((C2o,), jnp.float32)
    be2 = jnp.zeros((C2o,), jnp.float32)

    out2 = jax.block_until_ready(conv2d_forward(x2, w2, b2, g2, be2, activation=True))
    ref2 = _reference(x2, w2, b2, g2, be2, activation=True)
    assert out2.shape == (B2, H2, W2, C2o)
    assert jnp.allclose(out2, ref2, atol=1e-4, rtol=1e-4)

    # --- K-tiled accumulator path (used for huge weights on v7x); forced here -----
    B3, H3, W3, C3i, C3o = 1, 4, 5, 256, 128
    x3 = jax.random.normal(kx3, (B3, H3, W3, C3i), dtype=jnp.float32)
    bound3 = 1.0 / math.sqrt(C3i)
    w3 = jax.random.uniform(kw3, (C3i, C3o), jnp.float32, -bound3, bound3)
    b3 = jax.random.uniform(kb3, (C3o,), jnp.float32, -bound3, bound3)
    g3 = jnp.ones((C3o,), jnp.float32)
    be3 = jnp.zeros((C3o,), jnp.float32)

    out3 = jax.block_until_ready(
        conv2d_forward(x3, w3, b3, g3, be3, activation=True, _force_ktile=True))
    ref3 = _reference(x3, w3, b3, g3, be3, activation=True)
    assert out3.shape == (B3, H3, W3, C3o)
    assert jnp.allclose(out3, ref3, atol=1e-4, rtol=1e-4)

    print("KERNEL_OK")
</pallas_src>

<mosaic_0001>
module attributes {stable_mosaic.version = 11 : i64} {
  func.func @_packed_kernel(%arg0: i32, %arg1: memref<8x128xf32, #tpu.memory_space<vmem>>, %arg2: memref<128x1024xf32, #tpu.memory_space<vmem>>, %arg3: memref<8x1024xf32, #tpu.memory_space<vmem>>, %arg4: memref<1024x32xf32, #tpu.memory_space<vmem>>, %arg5: memref<32x1024xf32, #tpu.memory_space<vmem>>, %arg6: memref<8x1024xf32, #tpu.memory_space<vmem>>) attributes {dimension_semantics = [#tpu.dimension_semantics<parallel>], iteration_bounds = array<i64: 2>, scalar_prefetch = 0 : i64, scratch_operands = 0 : i64, tpu.core_type = #tpu.core_type<tc>, window_params = [{transform_indices = @transform_0, window_bounds = array<i64: 8, 128>}, {pipeline_mode = #tpu.pipeline_mode<synchronous>, transform_indices = @transform_1, window_bounds = array<i64: 128, 1024>}, {pipeline_mode = #tpu.pipeline_mode<synchronous>, transform_indices = @transform_2, window_bounds = array<i64: 8, 1024>}, {pipeline_mode = #tpu.pipeline_mode<synchronous>, transform_indices = @transform_3, window_bounds = array<i64: 1024, 32>}, {pipeline_mode = #tpu.pipeline_mode<synchronous>, transform_indices = @transform_4, window_bounds = array<i64: 32, 1024>}, {transform_indices = @transform_5, window_bounds = array<i64: 8, 1024>}]} {
    %c0 = arith.constant 0 : index
    %c0_0 = arith.constant 0 : index
    %0 = vector.load %arg1[%c0, %c0_0] : memref<8x128xf32, #tpu.memory_space<vmem>>, vector<8x128xf32>
    %c0_1 = arith.constant 0 : index
    %c0_2 = arith.constant 0 : index
    %1 = vector.load %arg2[%c0_1, %c0_2] : memref<128x1024xf32, #tpu.memory_space<vmem>>, vector<128x1024xf32>
    %cst = arith.constant dense<0.000000e+00> : vector<8x1024xf32>
    %2 = tpu.matmul %0, %1, %cst {dimension_numbers = #tpu.dot_dimension_numbers<[1], [0], [0], [1], [0, 0, 1, 1], [], []>} : vector<8x128xf32>, vector<128x1024xf32>, vector<8x1024xf32> -> vector<8x1024xf32>
    %c0_3 = arith.constant 0 : index
    %c0_4 = arith.constant 0 : index
    %3 = vector.load %arg3[%c0_3, %c0_4] : memref<8x1024xf32, #tpu.memory_space<vmem>>, vector<1x1024xf32>
    %4 = vector.broadcast %3 : vector<1x1024xf32> to vector<8x1024xf32>
    %5 = arith.addf %2, %4 : vector<8x1024xf32>
    %c1 = arith.constant 1 : index
    %c0_5 = arith.constant 0 : index
    %6 = vector.load %arg3[%c1, %c0_5] : memref<8x1024xf32, #tpu.memory_space<vmem>>, vector<1x1024xf32>
    %c2 = arith.constant 2 : index
    %c0_6 = arith.constant 0 : index
    %7 = vector.load %arg3[%c2, %c0_6] : memref<8x1024xf32, #tpu.memory_space<vmem>>, vector<1x1024xf32>
    %c0_7 = arith.constant 0 : index
    %c0_8 = arith.constant 0 : index
    %8 = vector.load %arg4[%c0_7, %c0_8] : memref<1024x32xf32, #tpu.memory_space<vmem>>, vector<1024x32xf32>
    %c0_9 = arith.constant 0 : index
    %c0_10 = arith.constant 0 : index
    %9 = vector.load %arg5[%c0_9, %c0_10] : memref<32x1024xf32, #tpu.memory_space<vmem>>, vector<32x1024xf32>
    %cst_11 = arith.constant dense<0.000000e+00> : vector<8x32xf32>
    %10 = tpu.matmul %5, %8, %cst_11 {dimension_numbers = #tpu.dot_dimension_numbers<[1], [0], [0], [1], [0, 0, 1, 1], [], []>} : vector<8x1024xf32>, vector<1024x32xf32>, vector<8x32xf32> -> vector<8x32xf32>
    %cst_12 = arith.constant dense<0.000000e+00> : vector<8x1024xf32>
    %11 = tpu.matmul %10, %9, %cst_12 {dimension_numbers = #tpu.dot_dimension_numbers<[1], [0], [0], [1], [0, 0, 1, 1], [], []>} : vector<8x32xf32>, vector<32x1024xf32>, vector<8x1024xf32> -> vector<8x1024xf32>
    %12 = arith.subf %5, %11 : vector<8x1024xf32>
    %13 = arith.mulf %12, %12 : vector<8x1024xf32>
    %cst_13 = arith.constant dense<0.000000e+00> : vector<8x32xf32>
    %14 = tpu.matmul %13, %8, %cst_13 {dimension_numbers = #tpu.dot_dimension_numbers<[1], [0], [0], [1], [0, 0, 1, 1], [], []>} : vector<8x1024xf32>, vector<1024x32xf32>, vector<8x32xf32> -> vector<8x32xf32>
    %cst_14 = arith.constant 9.99999974E-6 : f32
    %15 = vector.broadcast %cst_14 : f32 to vector<8x32xf32>
    %16 = arith.addf %14, %15 : vector<8x32xf32>
    %17 = math.rsqrt %16 : vector<8x32xf32>
    %cst_15 = arith.constant dense<0.000000e+00> : vector<8x1024xf32>
    %18 = tpu.matmul %17, %9, %cst_15 {dimension_numbers = #tpu.dot_dimension_numbers<[1], [0], [0], [1], [0, 0, 1, 1], [], []>} : vector<8x32xf32>, vector<32x1024xf32>, vector<8x1024xf32> -> vector<8x1024xf32>
    %19 = arith.mulf %12, %18 : vector<8x1024xf32>
    %20 = vector.broadcast %6 : vector<1x1024xf32> to vector<8x1024xf32>
    %21 = arith.mulf %19, %20 : vector<8x1024xf32>
    %22 = vector.broadcast %7 : vector<1x1024xf32> to vector<8x1024xf32>
    %23 = arith.addf %21, %22 : vector<8x1024xf32>
    %cst_16 = arith.constant 0.000000e+00 : f32
    %24 = vector.broadcast %cst_16 : f32 to vector<8x1024xf32>
    %25 = arith.maximumf %23, %24 : vector<8x1024xf32>
    %c0_17 = arith.constant 0 : index
    %c0_18 = arith.constant 0 : index
    %26 = vector.load %arg6[%c0_17, %c0_18] : memref<8x1024xf32, #tpu.memory_space<vmem>>, vector<8x1024xf32>
    tpu.vector_store %arg6[%c0_17, %c0_18], %25 {strides = array<i32>} : memref<8x1024xf32, #tpu.memory_space<vmem>>, vector<8x1024xf32>,
    return
  }
  func.func @transform_0(%arg0: i32) -> (i32, i32) {
    %c0_i32 = arith.constant 0 : i32
    %c0_i32_0 = arith.constant 0 : i32
    return %arg0, %c0_i32 : i32, i32
  }
  func.func @transform_1(%arg0: i32) -> (i32, i32) {
    %c0_i32 = arith.constant 0 : i32
    %c0_i32_0 = arith.constant 0 : i32
    %c0_i32_1 = arith.constant 0 : i32
    return %c0_i32, %c0_i32_0 : i32, i32
  }
  func.func @transform_2(%arg0: i32) -> (i32, i32) {
    %c0_i32 = arith.constant 0 : i32
    %c0_i32_0 = arith.constant 0 : i32
    %c0_i32_1 = arith.constant 0 : i32
    return %c0_i32, %c0_i32_0 : i32, i32
  }
  func.func @transform_3(%arg0: i32) -> (i32, i32) {
    %c0_i32 = arith.constant 0 : i32
    %c0_i32_0 = arith.constant 0 : i32
    %c0_i32_1 = arith.constant 0 : i32
    return %c0_i32, %c0_i32_0 : i32, i32
  }
  func.func @transform_4(%arg0: i32) -> (i32, i32) {
    %c0_i32 = arith.constant 0 : i32
    %c0_i32_0 = arith.constant 0 : i32
    %c0_i32_1 = arith.constant 0 : i32
    return %c0_i32, %c0_i32_0 : i32, i32
  }
  func.func @transform_5(%arg0: i32) -> (i32, i32) {
    %c0_i32 = arith.constant 0 : i32
    %c0_i32_0 = arith.constant 0 : i32
    return %arg0, %c0_i32 : i32, i32
  }
}

</mosaic_0001>

<llo_original>
// kernel: tpu_custom_call.1
$region0: #{tpu_custom_call.1}
  #allocation0 [shape = 'u32[]', space=smem, size = 0x4, offset = 0x4, fixed_abs, tag = 'smem constant byte address 0x4 - core index']
  #allocation1 [shape = 'u32[72,128]{1,0:T(1,128)}', space=vmem, size = 0x9000, scoped, tag = 'internal scratch']
  %s0 = inlined_call_operand.hbm [shape: f32[16,128], index: 0, kind: input, shape index: {}]
  %s1 = inlined_call_operand.vmem [shape: f32[128,1024], index: 1, kind: input, shape index: {}]
  %s2 = inlined_call_operand.hbm [shape: f32[8,1024], index: 2, kind: input, shape index: {}]
  %s3 = inlined_call_operand.vmem [shape: f32[1024,32], index: 3, kind: input, shape index: {}]
  %s4 = inlined_call_operand.vmem [shape: f32[32,1024], index: 4, kind: input, shape index: {}]
  %s5 = inlined_call_operand.hbm [shape: f32[16,1024], index: 5, kind: output, shape index: {}]
  %s6 = sld [smem:[#allocation0]]
  $region61: #{tpu_custom_call.1} parent=0
    _
  %s8 = ssub.s32 1, %s6
  %s9 = scalar_select 0, %s8, %s6
  $region1: #{tpu_custom_call.1} parent=0
    #allocation2 [shape = 'u8[8192]{0}', space=vmem, size = 0x2000, scoped, tag = 'input window, operand 0']
    #allocation3 [shape = 's32[2]{0}', space=sflag, size = 0x8, scoped, tag = 'scoped memory for tpu_custom_call.1']
    #allocation4 [shape = 's32[2]{0}', space=sflag, size = 0x8, scoped, tag = 'scoped memory for tpu_custom_call.1']
    #allocation5 [shape = 'u8[32768]{0}', space=vmem, size = 0x8000, scoped, tag = 'input window, operand 2, single buffered']
    #allocation6 [shape = 's32[1]{0}', space=sflag, size = 0x4, scoped, tag = 'scoped memory for tpu_custom_call.1']
    #allocation7 [shape = 'u8[65536]{0}', space=vmem, size = 0x10000, scoped, tag = 'output window, operand 0']
    %10 = vsyncpa [#allocation3], 0
    %s11 = scalar_lea.sflag [#allocation3], 1
    %12 = vsyncpa %s11, 0
    %13 = vsyncpa [#allocation6], 0
    %14 = vsyncpa [#allocation4], 0
    %s15 = scalar_lea.sflag [#allocation4], 1
    %16 = vsyncpa %s15, 0
    loop: start=0, step=1, limit=4
    $region2: #{tpu_custom_call.1} parent=1 // loop_pre_header
      _
    $region3: #{tpu_custom_call.1} parent=1 // loop_header
      %s18 = sphi 0, %s22
      %p19 = scmp.ge.s32.totalorder %s18, 4
      %s28 = sphi 0, %s30
      %s31 = sphi 0, %s28
      %s32 = sphi 0, %s31
      %s48 = sphi 0, %s32
      %s52 = sphi 0, %s52
      %s54 = sphi 0, %s52
      %s55 = sphi 0, %s54
      %s69 = sphi 0, %s55
      %s73 = sphi 0, %s73
      %s75 = sphi 0, %s73
      %s76 = sphi 0, %s75
      %s90 = sphi 0, %s76
      %s94 = sphi 0, %s94
      %s96 = sphi 0, %s94
      %s97 = sphi 0, %s96
      %s111 = sphi 0, %s97
      %s115 = sphi 0, %s115
      %s117 = sphi 0, %s115
      %s118 = sphi 0, %s117
      %s132 = sphi 0, %s118
      %s138 = sphi 0, %s140
      %s141 = sphi 0, %s138
      %s142 = sphi 0, %s141
      %s158 = sphi 0, %s142
    $region4: #{tpu_custom_call.1} parent=1 // loop_header_branch
      %21 = sbr.rel (%p19) target = $region8
    $region5: #{tpu_custom_call.1} parent=1 // loop_body
      %s23 = ssub.s32 %s18, 1
      %s24 = ssub.s32 %s18, 2
      %s25 = sadd.s32 %s18, 1
      %s26 = ssub.s32 %s18, %s25
      %p27 = scmp.eq.s32.totalorder %s26, 0
      %s29 = sadd.s32 %s28, 1
      %s30 = scalar_select %p27, %s28, %s29
      %p33 = pneg %p27
      %p34 = scmp.eq.s32.totalorder %s18, 1
      %p35 = por %p33, %p34
      %p36 = scmp.ne.s32.totalorder %s28, %s31
      %p37 = scmp.eq.s32.totalorder %s18, 0
      %p38 = por %p36, %p37
      %p39 = scmp.ne.s32.totalorder %s28, %s31
      %p40 = scmp.eq.s32.totalorder %s23, 1
      %p41 = por %p39, %p40
      %p42 = scmp.ne.s32.totalorder %s31, %s32
      %p43 = scmp.eq.s32.totalorder %s23, 0
      %p44 = por %p42, %p43
      %p45 = scmp.ne.s32.totalorder %s31, %s32
      %p46 = scmp.eq.s32.totalorder %s24, 1
      %p47 = por %p45, %p46
      %p49 = scmp.ne.s32.totalorder %s32, %s48
      %p50 = scmp.eq.s32.totalorder %s24, 0
      %p51 = por %p49, %p50
      %s53 = sadd.s32 %s52, 1
      %p56 = scmp.eq.s32.totalorder %s18, 1
      %p57 = scmp.ne.s32.totalorder %s52, %s54
      %p58 = scmp.eq.s32.totalorder %s18, 0
      %p59 = por %p57, %p58
      %p60 = scmp.ne.s32.totalorder %s52, %s54
      %p61 = scmp.eq.s32.totalorder %s23, 1
      %p62 = por %p60, %p61
      %p63 = scmp.ne.s32.totalorder %s54, %s55
      %p64 = scmp.eq.s32.totalorder %s23, 0
      %p65 = por %p63, %p64
      %p66 = scmp.ne.s32.totalorder %s54, %s55
      %p67 = scmp.eq.s32.totalorder %s24, 1
      %p68 = por %p66, %p67
      %p70 = scmp.ne.s32.totalorder %s55, %s69
      %p71 = scmp.eq.s32.totalorder %s24, 0
      %p72 = por %p70, %p71
      %s74 = sadd.s32 %s73, 1
      %p77 = scmp.eq.s32.totalorder %s18, 1
      %p78 = scmp.ne.s32.totalorder %s73, %s75
      %p79 = scmp.eq.s32.totalorder %s18, 0
      %p80 = por %p78, %p79
      %p81 = scmp.ne.s32.totalorder %s73, %s75
      %p82 = scmp.eq.s32.totalorder %s23, 1
      %p83 = por %p81, %p82
      %p84 = scmp.ne.s32.totalorder %s75, %s76
      %p85 = scmp.eq.s32.totalorder %s23, 0
      %p86 = por %p84, %p85
      %p87 = scmp.ne.s32.totalorder %s75, %s76
      %p88 = scmp.eq.s32.totalorder %s24, 1
      %p89 = por %p87, %p88
      %p91 = scmp.ne.s32.totalorder %s76, %s90
      %p92 = scmp.eq.s32.totalorder %s24, 0
      %p93 = por %p91, %p92
      %s95 = sadd.s32 %s94, 1
      %p98 = scmp.eq.s32.totalorder %s18, 1
      %p99 = scmp.ne.s32.totalorder %s94, %s96
      %p100 = scmp.eq.s32.totalorder %s18, 0
      %p101 = por %p99, %p100
      %p102 = scmp.ne.s32.totalorder %s94, %s96
      %p103 = scmp.eq.s32.totalorder %s23, 1
      %p104 = por %p102, %p103
      %p105 = scmp.ne.s32.totalorder %s96, %s97
      %p106 = scmp.eq.s32.totalorder %s23, 0
      %p107 = por %p105, %p106
      %p108 = scmp.ne.s32.totalorder %s96, %s97
      %p109 = scmp.eq.s32.totalorder %s24, 1
      %p110 = por %p108, %p109
      %p112 = scmp.ne.s32.totalorder %s97, %s111
      %p113 = scmp.eq.s32.totalorder %s24, 0
      %p114 = por %p112, %p113
      %s116 = sadd.s32 %s115, 1
      %p119 = scmp.eq.s32.totalorder %s18, 1
      %p120 = scmp.ne.s32.totalorder %s115, %s117
      %p121 = scmp.eq.s32.totalorder %s18, 0
      %p122 = por %p120, %p121
      %p123 = scmp.ne.s32.totalorder %s115, %s117
      %p124 = scmp.eq.s32.totalorder %s23, 1
      %p125 = por %p123, %p124
      %p126 = scmp.ne.s32.totalorder %s117, %s118
      %p127 = scmp.eq.s32.totalorder %s23, 0
      %p128 = por %p126, %p127
      %p129 = scmp.ne.s32.totalorder %s117, %s118
      %p130 = scmp.eq.s32.totalorder %s24, 1
      %p131 = por %p129, %p130
      %p133 = scmp.ne.s32.totalorder %s118, %s132
      %p134 = scmp.eq.s32.totalorder %s24, 0
      %p135 = por %p133, %p134
      %s136 = ssub.s32 %s18, %s25
      %p137 = scmp.eq.s32.totalorder %s136, 0
      %s139 = sadd.s32 %s138, 1
      %s140 = scalar_select %p137, %s138, %s139
      %p143 = pneg %p137
      %p144 = scmp.eq.s32.totalorder %s18, 1
      %p145 = por %p143, %p144
      %p146 = scmp.ne.s32.totalorder %s138, %s141
      %p147 = scmp.eq.s32.totalorder %s18, 0
      %p148 = por %p146, %p147
      %p149 = scmp.ne.s32.totalorder %s138, %s141
      %p150 = scmp.eq.s32.totalorder %s23, 1
      %p151 = por %p149, %p150
      %p152 = scmp.ne.s32.totalorder %s141, %s142
      %p153 = scmp.eq.s32.totalorder %s23, 0
      %p154 = por %p152, %p153
      %p155 = scmp.ne.s32.totalorder %s141, %s142
      %p156 = scmp.eq.s32.totalorder %s24, 1
      %p157 = por %p155, %p156
      %p159 = scmp.ne.s32.totalorder %s142, %s158
      %p160 = scmp.eq.s32.totalorder %s24, 0
      %p161 = por %p159, %p160
      %p162 = scmp.le.s32.totalorder 1, %s18
      %p163 = scmp.lt.s32.totalorder %s18, 3
      %p164 = pnand %p162, %p163
      %p165 = pneg %p164
      // Predicated region
      $region9: #{tpu_custom_call.1} parent=5 // pred_check
        _
      $region10: #{tpu_custom_call.1} parent=5 // pred_check_branch
        %167 = sbr.rel (%p164) target = $region12
      $region11: #{tpu_custom_call.1} parent=5 // pred_region
        %s168 = ssub.s32 %s18, 1
        // Predicated region
        $region13: #{tpu_custom_call.1} parent=11 // pred_check
          %p169 = pneg %p65
        $region14: #{tpu_custom_call.1} parent=11 // pred_check_branch
          %171 = sbr.rel (%p169) target = $region16
        $region15: #{tpu_custom_call.1} parent=11 // pred_region
          _
        $region16: #{tpu_custom_call.1} parent=11 // pred_fallthru
          _
        // Predicated region
        $region17: #{tpu_custom_call.1} parent=11 // pred_check
          %p172 = pneg %p86
        $region18: #{tpu_custom_call.1} parent=11 // pred_check_branch
          %174 = sbr.rel (%p172) target = $region20
        $region19: #{tpu_custom_call.1} parent=11 // pred_region
          %176 = vsyncadd [#allocation6], 0
          %s178 = sshll.u32 %s2, 4
          %s179 = int_to_ptr.hbm [resolvable:$true] %s178
          %s180 = sshll.u32 [#allocation5], 4
          %s181 = int_to_ptr.vmem [resolvable:$true] %s180
          %183 = dma.hbm_to_vmem [thread:$0]  %s179, 1024, %s181, [#allocation6]
        $region20: #{tpu_custom_call.1} parent=11 // pred_fallthru
          _
        // Predicated region
        $region21: #{tpu_custom_call.1} parent=11 // pred_check
          %p184 = pneg %p107
        $region22: #{tpu_custom_call.1} parent=11 // pred_check_branch
          %186 = sbr.rel (%p184) target = $region24
        $region23: #{tpu_custom_call.1} parent=11 // pred_region
          _
        $region24: #{tpu_custom_call.1} parent=11 // pred_fallthru
          _
        // Predicated region
        $region25: #{tpu_custom_call.1} parent=11 // pred_check
          %p187 = pneg %p128
        $region26: #{tpu_custom_call.1} parent=11 // pred_check_branch
          %189 = sbr.rel (%p187) target = $region28
        $region27: #{tpu_custom_call.1} parent=11 // pred_region
          _
        $region28: #{tpu_custom_call.1} parent=11 // pred_fallthru
          _
      $region12: #{tpu_custom_call.1} parent=5 // pred_fallthru
        _
      %p190 = scmp.lt.s32.totalorder %s18, 2
      // Predicated region
      $region29: #{tpu_custom_call.1} parent=5 // pred_check
        %p191 = pneg %p190
      $region30: #{tpu_custom_call.1} parent=5 // pred_check_branch
        %193 = sbr.rel (%p191) target = $region32
      $region31: #{tpu_custom_call.1} parent=5 // pred_region
        // Predicated region
        $region33: #{tpu_custom_call.1} parent=31 // pred_check
          %p194 = pneg %p38
        $region34: #{tpu_custom_call.1} parent=31 // pred_check_branch
          %196 = sbr.rel (%p194) target = $region36
        $region35: #{tpu_custom_call.1} parent=31 // pred_region
          %s197 = sand.u32 %s28, 1
          %s198 = scalar_lea.sflag [#allocation3], %s197
          %s199 = sand.u32 %s28, 1
          %s200 = smul.addr %s199, 8
          %s201 = scalar_lea.vmem [#allocation2], %s200
          %203 = vsyncadd %s198, 0
          %s204 = smul.addr %s18, 8
          %s205 = scalar_lea.hbm %s0, %s204
          %s207 = sshll.u32 %s205, 4
          %s208 = int_to_ptr.hbm [resolvable:$true] %s207
          %s209 = sshll.u32 %s201, 4
          %s210 = int_to_ptr.vmem [resolvable:$true] %s209
          %212 = dma.hbm_to_vmem [thread:$0]  %s208, 128, %s210, %s198
        $region36: #{tpu_custom_call.1} parent=31 // pred_fallthru
          _
      $region32: #{tpu_custom_call.1} parent=5 // pred_fallthru
        _
      %p213 = scmp.le.s32.totalorder 1, %s18
      %p214 = scmp.lt.s32.totalorder %s18, 3
      %p215 = pnand %p213, %p214
      %p216 = pneg %p215
      // Predicated region
      $region37: #{tpu_custom_call.1} parent=5 // pred_check
        _
      $region38: #{tpu_custom_call.1} parent=5 // pred_check_branch
        %218 = sbr.rel (%p215) target = $region40
      $region39: #{tpu_custom_call.1} parent=5 // pred_region
        %s219 = ssub.s32 %s18, 1
        %s220 = sand.u32 %s31, 1
        %s221 = scalar_lea.sflag [#allocation3], %s220
        %s222 = sand.u32 %s31, 1
        %s223 = smul.addr %s222, 8
        %s224 = scalar_lea.vmem [#allocation2], %s223
        // Predicated region
        $region41: #{tpu_custom_call.1} parent=39 // pred_check
          %p225 = pneg %p44
        $region42: #{tpu_custom_call.1} parent=39 // pred_check_branch
          %227 = sbr.rel (%p225) target = $region44
        $region43: #{tpu_custom_call.1} parent=39 // pred_region
          %229 = dma.done %s221, 128
        $region44: #{tpu_custom_call.1} parent=39 // pred_fallthru
          _
        // Predicated region
        $region45: #{tpu_custom_call.1} parent=39 // pred_check
          %p230 = pneg %p86
        $region46: #{tpu_custom_call.1} parent=39 // pred_check_branch
          %232 = sbr.rel (%p230) target = $region48
        $region47: #{tpu_custom_call.1} parent=39 // pred_region
          %234 = dma.done [#allocation6], 1024
        $region48: #{tpu_custom_call.1} parent=39 // pred_fallthru
          _
        %s235 = sand.u32 %s31, 1
        %s236 = scalar_lea.sflag [#allocation3], %s235
        %s237 = sand.u32 %s31, 1
        %s238 = smul.addr %s237, 8
        %s239 = scalar_lea.vmem [#allocation2], %s238
        %p240 = pneg %p44
        %p241 = pneg %p41
        %p242 = pneg %p65
        %p243 = pneg %p62
        %p244 = pneg %p86
        %p245 = pneg %p83
        %p246 = pneg %p107
        %p247 = pneg %p104
        %p248 = pneg %p128
        %p249 = pneg %p125
        %p250 = pneg %p154
        %p251 = pneg %p151
        %s252 = sand.u32 %s141, 1
        %s253 = scalar_lea.sflag [#allocation4], %s252
        %s254 = sand.u32 %s141, 1
        %s255 = smul.addr %s254, 64
        %s256 = scalar_lea.vmem [#allocation7], %s255
        %v257 = vld [vmem:[%s224] sm:$0xff]
        %v258 = vld [vmem:[%s1] sm:$0xff]
        %v259 = vld [vmem:[%s1 + $0x8] sm:$0xff]
        %v260 = vld [vmem:[%s1 + $0x10] sm:$0xff]
        %v261 = vld [vmem:[%s1 + $0x18] sm:$0xff]
        %v262 = vld [vmem:[%s1 + $0x20] sm:$0xff]
        %v263 = vld [vmem:[%s1 + $0x28] sm:$0xff]
        %v264 = vld [vmem:[%s1 + $0x30] sm:$0xff]
        %v265 = vld [vmem:[%s1 + $0x38] sm:$0xff]
        %v266 = vld [vmem:[%s1 + $0x40] sm:$0xff]
        %v267 = vld [vmem:[%s1 + $0x48] sm:$0xff]
        %v268 = vld [vmem:[%s1 + $0x50] sm:$0xff]
        %v269 = vld [vmem:[%s1 + $0x58] sm:$0xff]
        %v270 = vld [vmem:[%s1 + $0x60] sm:$0xff]
        %v271 = vld [vmem:[%s1 + $0x68] sm:$0xff]
        %v272 = vld [vmem:[%s1 + $0x70] sm:$0xff]
        %v273 = vld [vmem:[%s1 + $0x78] sm:$0xff]
        %v274 = vld [vmem:[%s1 + $0x80] sm:$0xff]
        %v275 = vld [vmem:[%s1 + $0x88] sm:$0xff]
        %v276 = vld [vmem:[%s1 + $0x90] sm:$0xff]
        %v277 = vld [vmem:[%s1 + $0x98] sm:$0xff]
        %v278 = vld [vmem:[%s1 + $0xa0] sm:$0xff]
        %v279 = vld [vmem:[%s1 + $0xa8] sm:$0xff]
        %v280 = vld [vmem:[%s1 + $0xb0] sm:$0xff]
        %v281 = vld [vmem:[%s1 + $0xb8] sm:$0xff]
        %v282 = vld [vmem:[%s1 + $0xc0] sm:$0xff]
        %v283 = vld [vmem:[%s1 + $0xc8] sm:$0xff]
        %v284 = vld [vmem:[%s1 + $0xd0] sm:$0xff]
        %v285 = vld [vmem:[%s1 + $0xd8] sm:$0xff]
        %v286 = vld [vmem:[%s1 + $0xe0] sm:$0xff]
        %v287 = vld [vmem:[%s1 + $0xe8] sm:$0xff]
        %v288 = vld [vmem:[%s1 + $0xf0] sm:$0xff]
        %v289 = vld [vmem:[%s1 + $0xf8] sm:$0xff]
        %v290 = vld [vmem:[%s1 + $0x100] sm:$0xff]
        %v291 = vld [vmem:[%s1 + $0x108] sm:$0xff]
        %v292 = vld [vmem:[%s1 + $0x110] sm:$0xff]
        %v293 = vld [vmem:[%s1 + $0x118] sm:$0xff]
        %v294 = vld [vmem:[%s1 + $0x120] sm:$0xff]
        %v295 = vld [vmem:[%s1 + $0x128] sm:$0xff]
        %v296 = vld [vmem:[%s1 + $0x130] sm:$0xff]
        %v297 = vld [vmem:[%s1 + $0x138] sm:$0xff]
        %v298 = vld [vmem:[%s1 + $0x140] sm:$0xff]
        %v299 = vld [vmem:[%s1 + $0x148] sm:$0xff]
        %v300 = vld [vmem:[%s1 + $0x150] sm:$0xff]
        %v301 = vld [vmem:[%s1 + $0x158] sm:$0xff]
        %v302 = vld [vmem:[%s1 + $0x160] sm:$0xff]
        %v303 = vld [vmem:[%s1 + $0x168] sm:$0xff]
        %v304 = vld [vmem:[%s1 + $0x170] sm:$0xff]
        %v305 = vld [vmem:[%s1 + $0x178] sm:$0xff]
        %v306 = vld [vmem:[%s1 + $0x180] sm:$0xff]
        %v307 = vld [vmem:[%s1 + $0x188] sm:$0xff]
        %v308 = vld [vmem:[%s1 + $0x190] sm:$0xff]
        %v309 = vld [vmem:[%s1 + $0x198] sm:$0xff]
        %v310 = vld [vmem:[%s1 + $0x1a0] sm:$0xff]
        %v311 = vld [vmem:[%s1 + $0x1a8] sm:$0xff]
        %v312 = vld [vmem:[%s1 + $0x1b0] sm:$0xff]
        %v313 = vld [vmem:[%s1 + $0x1b8] sm:$0xff]
        %v314 = vld [vmem:[%s1 + $0x1c0] sm:$0xff]
        %v315 = vld [vmem:[%s1 + $0x1c8] sm:$0xff]
        %v316 = vld [vmem:[%s1 + $0x1d0] sm:$0xff]
        %v317 = vld [vmem:[%s1 + $0x1d8] sm:$0xff]
        %v318 = vld [vmem:[%s1 + $0x1e0] sm:$0xff]
        %v319 = vld [vmem:[%s1 + $0x1e8] sm:$0xff]
        %v320 = vld [vmem:[%s1 + $0x1f0] sm:$0xff]
        %v321 = vld [vmem:[%s1 + $0x1f8] sm:$0xff]
        %v322 = vld [vmem:[%s1 + $0x200] sm:$0xff]
        %v323 = vld [vmem:[%s1 + $0x208] sm:$0xff]
        %v324 = vld [vmem:[%s1 + $0x210] sm:$0xff]
        %v325 = vld [vmem:[%s1 + $0x218] sm:$0xff]
        %v326 = vld [vmem:[%s1 + $0x220] sm:$0xff]
        %v327 = vld [vmem:[%s1 + $0x228] sm:$0xff]
        %v328 = vld [vmem:[%s1 + $0x230] sm:$0xff]
        %v329 = vld [vmem:[%s1 + $0x238] sm:$0xff]
        %v330 = vld [vmem:[%s1 + $0x240] sm:$0xff]
        %v331 = vld [vmem:[%s1 + $0x248] sm:$0xff]
        %v332 = vld [vmem:[%s1 + $0x250] sm:$0xff]
        %v333 = vld [vmem:[%s1 + $0x258] sm:$0xff]
        %v334 = vld [vmem:[%s1 + $0x260] sm:$0xff]
        %v335 = vld [vmem:[%s1 + $0x268] sm:$0xff]
        %v336 = vld [vmem:[%s1 + $0x270] sm:$0xff]
        %v337 = vld [vmem:[%s1 + $0x278] sm:$0xff]
        %v338 = vld [vmem:[%s1 + $0x280] sm:$0xff]
        %v339 = vld [vmem:[%s1 + $0x288] sm:$0xff]
        %v340 = vld [vmem:[%s1 + $0x290] sm:$0xff]
        %v341 = vld [vmem:[%s1 + $0x298] sm:$0xff]
        %v342 = vld [vmem:[%s1 + $0x2a0] sm:$0xff]
        %v343 = vld [vmem:[%s1 + $0x2a8] sm:$0xff]
        %v344 = vld [vmem:[%s1 + $0x2b0] sm:$0xff]
        %v345 = vld [vmem:[%s1 + $0x2b8] sm:$0xff]
        %v346 = vld [vmem:[%s1 + $0x2c0] sm:$0xff]
        %v347 = vld [vmem:[%s1 + $0x2c8] sm:$0xff]
        %v348 = vld [vmem:[%s1 + $0x2d0] sm:$0xff]
        %v349 = vld [vmem:[%s1 + $0x2d8] sm:$0xff]
        %v350 = vld [vmem:[%s1 + $0x2e0] sm:$0xff]
        %v351 = vld [vmem:[%s1 + $0x2e8] sm:$0xff]
        %v352 = vld [vmem:[%s1 + $0x2f0] sm:$0xff]
        %v353 = vld [vmem:[%s1 + $0x2f8] sm:$0xff]
        %v354 = vld [vmem:[%s1 + $0x300] sm:$0xff]
        %v355 = vld [vmem:[%s1 + $0x308] sm:$0xff]
        %v356 = vld [vmem:[%s1 + $0x310] sm:$0xff]
        %v357 = vld [vmem:[%s1 + $0x318] sm:$0xff]
        %v358 = vld [vmem:[%s1 + $0x320] sm:$0xff]
        %v359 = vld [vmem:[%s1 + $0x328] sm:$0xff]
        %v360 = vld [vmem:[%s1 + $0x330] sm:$0xff]
        %v361 = vld [vmem:[%s1 + $0x338] sm:$0xff]
        %v362 = vld [vmem:[%s1 + $0x340] sm:$0xff]
        %v363 = vld [vmem:[%s1 + $0x348] sm:$0xff]
        %v364 = vld [vmem:[%s1 + $0x350] sm:$0xff]
        %v365 = vld [vmem:[%s1 + $0x358] sm:$0xff]
        %v366 = vld [vmem:[%s1 + $0x360] sm:$0xff]
        %v367 = vld [vmem:[%s1 + $0x368] sm:$0xff]
        %v368 = vld [vmem:[%s1 + $0x370] sm:$0xff]
        %v369 = vld [vmem:[%s1 + $0x378] sm:$0xff]
        %v370 = vld [vmem:[%s1 + $0x380] sm:$0xff]
        %v371 = vld [vmem:[%s1 + $0x388] sm:$0xff]
        %v372 = vld [vmem:[%s1 + $0x390] sm:$0xff]
        %v373 = vld [vmem:[%s1 + $0x398] sm:$0xff]
        %v374 = vld [vmem:[%s1 + $0x3a0] sm:$0xff]
        %v375 = vld [vmem:[%s1 + $0x3a8] sm:$0xff]
        %v376 = vld [vmem:[%s1 + $0x3b0] sm:$0xff]
        %v377 = vld [vmem:[%s1 + $0x3b8] sm:$0xff]
        %v378 = vld [vmem:[%s1 + $0x3c0] sm:$0xff]
        %v379 = vld [vmem:[%s1 + $0x3c8] sm:$0xff]
        %v380 = vld [vmem:[%s1 + $0x3d0] sm:$0xff]
        %v381 = vld [vmem:[%s1 + $0x3d8] sm:$0xff]
        %v382 = vld [vmem:[%s1 + $0x3e0] sm:$0xff]
        %v383 = vld [vmem:[%s1 + $0x3e8] sm:$0xff]
        %v384 = vld [vmem:[%s1 + $0x3f0] sm:$0xff]
        %v385 = vld [vmem:[%s1 + $0x3f8] sm:$0xff]
        %v386 = vld [vmem:[#allocation5] ss:$8 sm:$0xf]
        %v387 = vld [vmem:[#allocation5] ss:$8 sm:$0xf0]
        %v388 = vor.u32 %v386, %v387
        %v390 = vperm.slane %v388, 0
        %v391 = vperm.slane %v388, 1
        %v392 = vperm.slane %v388, 2
        %v393 = vperm.slane %v388, 3
        %v394 = vperm.slane %v388, 4
        %v395 = vperm.slane %v388, 5
        %v396 = vperm.slane %v388, 6
        %v397 = vperm.slane %v388, 7
        %406 = vmatpush.msra.mxu0 %v378
        %407 = vmatpush.msra.mxu0 %v370
        %408 = vmatpush.msra.mxu0 %v362
        %409 = vmatpush.msra.mxu0 %v354
        %410 = vmatpush.msra.mxu0 %v346
        %411 = vmatpush.msra.mxu0 %v338
        %412 = vmatpush.msra.mxu0 %v330
        %413 = vmatpush.msra.mxu0 %v322
        %414 = vmatpush.msra.mxu0 %v314
        %415 = vmatpush.msra.mxu0 %v306
        %416 = vmatpush.msra.mxu0 %v298
        %417 = vmatpush.msra.mxu0 %v290
        %418 = vmatpush.msra.mxu0 %v282
        %419 = vmatpush.msra.mxu0 %v274
        %420 = vmatpush.msra.mxu0 %v266
        %421 = vmatpush.msra.mxu0 %v258
        %422 = vmatmul.f32.gmra.mxu0 %v257
        %v423 = vpop.f32.mrf.mxu0
        %v424 = vadd.f32 %v390, %v423
        %425 = vdwg.mxu0
        %426 = vmatpush.msra.mxu0 %v379
        %427 = vmatpush.msra.mxu0 %v371
        %428 = vmatpush.msra.mxu0 %v363
        %429 = vmatpush.msra.mxu0 %v355
        %430 = vmatpush.msra.mxu0 %v347
        %431 = vmatpush.msra.mxu0 %v339
        %432 = vmatpush.msra.mxu0 %v331
        %433 = vmatpush.msra.mxu0 %v323
        %434 = vmatpush.msra.mxu0 %v315
        %435 = vmatpush.msra.mxu0 %v307
        %436 = vmatpush.msra.mxu0 %v299
        %437 = vmatpush.msra.mxu0 %v291
        %438 = vmatpush.msra.mxu0 %v283
        %439 = vmatpush.msra.mxu0 %v275
        %440 = vmatpush.msra.mxu0 %v267
        %441 = vmatpush.msra.mxu0 %v259
        %442 = vmatmul.f32.gmra.mxu0 %v257
        %v443 = vpop.f32.mrf.mxu0
        %v444 = vadd.f32 %v391, %v443
        %445 = vdwg.mxu0
        %446 = vmatpush.msra.mxu0 %v380
        %447 = vmatpush.msra.mxu0 %v372
        %448 = vmatpush.msra.mxu0 %v364
        %449 = vmatpush.msra.mxu0 %v356
        %450 = vmatpush.msra.mxu0 %v348
        %451 = vmatpush.msra.mxu0 %v340
        %452 = vmatpush.msra.mxu0 %v332
        %453 = vmatpush.msra.mxu0 %v324
        %454 = vmatpush.msra.mxu0 %v316
        %455 = vmatpush.msra.mxu0 %v308
        %456 = vmatpush.msra.mxu0 %v300
        %457 = vmatpush.msra.mxu0 %v292
        %458 = vmatpush.msra.mxu0 %v284
        %459 = vmatpush.msra.mxu0 %v276
        %460 = vmatpush.msra.mxu0 %v268
        %461 = vmatpush.msra.mxu0 %v260
        %462 = vmatmul.f32.gmra.mxu0 %v257
        %v463 = vpop.f32.mrf.mxu0
        %v464 = vadd.f32 %v392, %v463
        %465 = vdwg.mxu0
        %466 = vmatpush.msra.mxu0 %v381
        %467 = vmatpush.msra.mxu0 %v373
        %468 = vmatpush.msra.mxu0 %v365
        %469 = vmatpush.msra.mxu0 %v357
        %470 = vmatpush.msra.mxu0 %v349
        %471 = vmatpush.msra.mxu0 %v341
        %472 = vmatpush.msra.mxu0 %v333
        %473 = vmatpush.msra.mxu0 %v325
        %474 = vmatpush.msra.mxu0 %v317
        %475 = vmatpush.msra.mxu0 %v309
        %476 = vmatpush.msra.mxu0 %v301
        %477 = vmatpush.msra.mxu0 %v293
        %478 = vmatpush.msra.mxu0 %v285
        %479 = vmatpush.msra.mxu0 %v277
        %480 = vmatpush.msra.mxu0 %v269
        %481 = vmatpush.msra.mxu0 %v261
        %482 = vmatmul.f32.gmra.mxu0 %v257
        %v483 = vpop.f32.mrf.mxu0
        %v484 = vadd.f32 %v393, %v483
        %485 = vdwg.mxu0
        %486 = vmatpush.msra.mxu0 %v382
        %487 = vmatpush.msra.mxu0 %v374
        %488 = vmatpush.msra.mxu0 %v366
        %489 = vmatpush.msra.mxu0 %v358
        %490 = vmatpush.msra.mxu0 %v350
        %491 = vmatpush.msra.mxu0 %v342
        %492 = vmatpush.msra.mxu0 %v334
        %493 = vmatpush.msra.mxu0 %v326
        %494 = vmatpush.msra.mxu0 %v318
        %495 = vmatpush.msra.mxu0 %v310
        %496 = vmatpush.msra.mxu0 %v302
        %497 = vmatpush.msra.mxu0 %v294
        %498 = vmatpush.msra.mxu0 %v286
        %499 = vmatpush.msra.mxu0 %v278
        %500 = vmatpush.msra.mxu0 %v270
        %501 = vmatpush.msra.mxu0 %v262
        %502 = vmatmul.f32.gmra.mxu0 %v257
        %v503 = vpop.f32.mrf.mxu0
        %v504 = vadd.f32 %v394, %v503
        %505 = vdwg.mxu0
        %506 = vmatpush.msra.mxu0 %v383
        %507 = vmatpush.msra.mxu0 %v375
        %508 = vmatpush.msra.mxu0 %v367
        %509 = vmatpush.msra.mxu0 %v359
        %510 = vmatpush.msra.mxu0 %v351
        %511 = vmatpush.msra.mxu0 %v343
        %512 = vmatpush.msra.mxu0 %v335
        %513 = vmatpush.msra.mxu0 %v327
        %514 = vmatpush.msra.mxu0 %v319
        %515 = vmatpush.msra.mxu0 %v311
        %516 = vmatpush.msra.mxu0 %v303
        %517 = vmatpush.msra.mxu0 %v295
        %518 = vmatpush.msra.mxu0 %v287
        %519 = vmatpush.msra.mxu0 %v279
        %520 = vmatpush.msra.mxu0 %v271
        %521 = vmatpush.msra.mxu0 %v263
        %522 = vmatmul.f32.gmra.mxu0 %v257
        %v523 = vpop.f32.mrf.mxu0
        %v524 = vadd.f32 %v395, %v523
        %525 = vdwg.mxu0
        %526 = vmatpush.msra.mxu0 %v384
        %527 = vmatpush.msra.mxu0 %v376
        %528 = vmatpush.msra.mxu0 %v368
        %529 = vmatpush.msra.mxu0 %v360
        %530 = vmatpush.msra.mxu0 %v352
        %531 = vmatpush.msra.mxu0 %v344
        %532 = vmatpush.msra.mxu0 %v336
        %533 = vmatpush.msra.mxu0 %v328
        %534 = vmatpush.msra.mxu0 %v320
        %535 = vmatpush.msra.mxu0 %v312
        %536 = vmatpush.msra.mxu0 %v304
        %537 = vmatpush.msra.mxu0 %v296
        %538 = vmatpush.msra.mxu0 %v288
        %539 = vmatpush.msra.mxu0 %v280
        %540 = vmatpush.msra.mxu0 %v272
        %541 = vmatpush.msra.mxu0 %v264
        %542 = vmatmul.f32.gmra.mxu0 %v257
        %v543 = vpop.f32.mrf.mxu0
        %v544 = vadd.f32 %v396, %v543
        %545 = vdwg.mxu0
        %546 = vmatpush.msra.mxu0 %v385
        %547 = vmatpush.msra.mxu0 %v377
        %548 = vmatpush.msra.mxu0 %v369
        %549 = vmatpush.msra.mxu0 %v361
        %550 = vmatpush.msra.mxu0 %v353
        %551 = vmatpush.msra.mxu0 %v345
        %552 = vmatpush.msra.mxu0 %v337
        %553 = vmatpush.msra.mxu0 %v329
        %554 = vmatpush.msra.mxu0 %v321
        %555 = vmatpush.msra.mxu0 %v313
        %556 = vmatpush.msra.mxu0 %v305
        %557 = vmatpush.msra.mxu0 %v297
        %558 = vmatpush.msra.mxu0 %v289
        %559 = vmatpush.msra.mxu0 %v281
        %560 = vmatpush.msra.mxu0 %v273
        %561 = vmatpush.msra.mxu0 %v265
        %562 = vmatmul.f32.gmra.mxu0 %v257
        %v563 = vpop.f32.mrf.mxu0
        %v564 = vadd.f32 %v397, %v563
        %565 = vdwg.mxu0
        %s566 = scalar_lea.vmem [#allocation5], 1
        %v567 = vld [vmem:[%s566] ss:$8 sm:$0xf]
        %v568 = vld [vmem:[%s566] ss:$8 sm:$0xf0]
        %v569 = vor.u32 %v567, %v568
        %s570 = scalar_lea.vmem [#allocation5], 2
        %v571 = vld [vmem:[%s570] ss:$8 sm:$0xf]
        %v572 = vld [vmem:[%s570] ss:$8 sm:$0xf0]
        %v573 = vor.u32 %v571, %v572
        %v574 = vld [vmem:[%s3] sm:$0xff]
        %v575 = vld [vmem:[%s3 + $0x8] sm:$0xff]
        %v576 = vld [vmem:[%s3 + $0x10] sm:$0xff]
        %v577 = vld [vmem:[%s3 + $0x18] sm:$0xff]
        %v578 = vld [vmem:[%s3 + $0x20] sm:$0xff]
        %v579 = vld [vmem:[%s3 + $0x28] sm:$0xff]
        %v580 = vld [vmem:[%s3 + $0x30] sm:$0xff]
        %v581 = vld [vmem:[%s3 + $0x38] sm:$0xff]
        %v582 = vld [vmem:[%s3 + $0x40] sm:$0xff]
        %v583 = vld [vmem:[%s3 + $0x48] sm:$0xff]
        %v584 = vld [vmem:[%s3 + $0x50] sm:$0xff]
        %v585 = vld [vmem:[%s3 + $0x58] sm:$0xff]
        %v586 = vld [vmem:[%s3 + $0x60] sm:$0xff]
        %v587 = vld [vmem:[%s3 + $0x68] sm:$0xff]
        %v588 = vld [vmem:[%s3 + $0x70] sm:$0xff]
        %v589 = vld [vmem:[%s3 + $0x78] sm:$0xff]
        %v590 = vld [vmem:[%s3 + $0x80] sm:$0xff]
        %v591 = vld [vmem:[%s3 + $0x88] sm:$0xff]
        %v592 = vld [vmem:[%s3 + $0x90] sm:$0xff]
        %v593 = vld [vmem:[%s3 + $0x98] sm:$0xff]
        %v594 = vld [vmem:[%s3 + $0xa0] sm:$0xff]
        %v595 = vld [vmem:[%s3 + $0xa8] sm:$0xff]
        %v596 = vld [vmem:[%s3 + $0xb0] sm:$0xff]
        %v597 = vld [vmem:[%s3 + $0xb8] sm:$0xff]
        %v598 = vld [vmem:[%s3 + $0xc0] sm:$0xff]
        %v599 = vld [vmem:[%s3 + $0xc8] sm:$0xff]
        %v600 = vld [vmem:[%s3 + $0xd0] sm:$0xff]
        %v601 = vld [vmem:[%s3 + $0xd8] sm:$0xff]
        %v602 = vld [vmem:[%s3 + $0xe0] sm:$0xff]
        %v603 = vld [vmem:[%s3 + $0xe8] sm:$0xff]
        %v604 = vld [vmem:[%s3 + $0xf0] sm:$0xff]
        %v605 = vld [vmem:[%s3 + $0xf8] sm:$0xff]
        %v606 = vld [vmem:[%s3 + $0x100] sm:$0xff]
        %v607 = vld [vmem:[%s3 + $0x108] sm:$0xff]
        %v608 = vld [vmem:[%s3 + $0x110] sm:$0xff]
        %v609 = vld [vmem:[%s3 + $0x118] sm:$0xff]
        %v610 = vld [vmem:[%s3 + $0x120] sm:$0xff]
        %v611 = vld [vmem:[%s3 + $0x128] sm:$0xff]
        %v612 = vld [vmem:[%s3 + $0x130] sm:$0xff]
        %v613 = vld [vmem:[%s3 + $0x138] sm:$0xff]
        %v614 = vld [vmem:[%s3 + $0x140] sm:$0xff]
        %v615 = vld [vmem:[%s3 + $0x148] sm:$0xff]
        %v616 = vld [vmem:[%s3 + $0x150] sm:$0xff]
        %v617 = vld [vmem:[%s3 + $0x158] sm:$0xff]
        %v618 = vld [vmem:[%s3 + $0x160] sm:$0xff]
        %v619 = vld [vmem:[%s3 + $0x168] sm:$0xff]
        %v620 = vld [vmem:[%s3 + $0x170] sm:$0xff]
        %v621 = vld [vmem:[%s3 + $0x178] sm:$0xff]
        %v622 = vld [vmem:[%s3 + $0x180] sm:$0xff]
        %v623 = vld [vmem:[%s3 + $0x188] sm:$0xff]
        %v624 = vld [vmem:[%s3 + $0x190] sm:$0xff]
        %v625 = vld [vmem:[%s3 + $0x198] sm:$0xff]
        %v626 = vld [vmem:[%s3 + $0x1a0] sm:$0xff]
        %v627 = vld [vmem:[%s3 + $0x1a8] sm:$0xff]
        %v628 = vld [vmem:[%s3 + $0x1b0] sm:$0xff]
        %v629 = vld [vmem:[%s3 + $0x1b8] sm:$0xff]
        %v630 = vld [vmem:[%s3 + $0x1c0] sm:$0xff]
        %v631 = vld [vmem:[%s3 + $0x1c8] sm:$0xff]
        %v632 = vld [vmem:[%s3 + $0x1d0] sm:$0xff]
        %v633 = vld [vmem:[%s3 + $0x1d8] sm:$0xff]
        %v634 = vld [vmem:[%s3 + $0x1e0] sm:$0xff]
        %v635 = vld [vmem:[%s3 + $0x1e8] sm:$0xff]
        %v636 = vld [vmem:[%s3 + $0x1f0] sm:$0xff]
        %v637 = vld [vmem:[%s3 + $0x1f8] sm:$0xff]
        %v638 = vld [vmem:[%s3 + $0x200] sm:$0xff]
        %v639 = vld [vmem:[%s3 + $0x208] sm:$0xff]
        %v640 = vld [vmem:[%s3 + $0x210] sm:$0xff]
        %v641 = vld [vmem:[%s3 + $0x218] sm:$0xff]
        %v642 = vld [vmem:[%s3 + $0x220] sm:$0xff]
        %v643 = vld [vmem:[%s3 + $0x228] sm:$0xff]
        %v644 = vld [vmem:[%s3 + $0x230] sm:$0xff]
        %v645 = vld [vmem:[%s3 + $0x238] sm:$0xff]
        %v646 = vld [vmem:[%s3 + $0x240] sm:$0xff]
        %v647 = vld [vmem:[%s3 + $0x248] sm:$0xff]
        %v648 = vld [vmem:[%s3 + $0x250] sm:$0xff]
        %v649 = vld [vmem:[%s3 + $0x258] sm:$0xff]
        %v650 = vld [vmem:[%s3 + $0x260] sm:$0xff]
        %v651 = vld [vmem:[%s3 + $0x268] sm:$0xff]
        %v652 = vld [vmem:[%s3 + $0x270] sm:$0xff]
        %v653 = vld [vmem:[%s3 + $0x278] sm:$0xff]
        %v654 = vld [vmem:[%s3 + $0x280] sm:$0xff]
        %v655 = vld [vmem:[%s3 + $0x288] sm:$0xff]
        %v656 = vld [vmem:[%s3 + $0x290] sm:$0xff]
        %v657 = vld [vmem:[%s3 + $0x298] sm:$0xff]
        %v658 = vld [vmem:[%s3 + $0x2a0] sm:$0xff]
        %v659 = vld [vmem:[%s3 + $0x2a8] sm:$0xff]
        %v660 = vld [vmem:[%s3 + $0x2b0] sm:$0xff]
        %v661 = vld [vmem:[%s3 + $0x2b8] sm:$0xff]
        %v662 = vld [vmem:[%s3 + $0x2c0] sm:$0xff]
        %v663 = vld [vmem:[%s3 + $0x2c8] sm:$0xff]
        %v664 = vld [vmem:[%s3 + $0x2d0] sm:$0xff]
        %v665 = vld [vmem:[%s3 + $0x2d8] sm:$0xff]
        %v666 = vld [vmem:[%s3 + $0x2e0] sm:$0xff]
        %v667 = vld [vmem:[%s3 + $0x2e8] sm:$0xff]
        %v668 = vld [vmem:[%s3 + $0x2f0] sm:$0xff]
        %v669 = vld [vmem:[%s3 + $0x2f8] sm:$0xff]
        %v670 = vld [vmem:[%s3 + $0x300] sm:$0xff]
        %v671 = vld [vmem:[%s3 + $0x308] sm:$0xff]
        %v672 = vld [vmem:[%s3 + $0x310] sm:$0xff]
        %v673 = vld [vmem:[%s3 + $0x318] sm:$0xff]
        %v674 = vld [vmem:[%s3 + $0x320] sm:$0xff]
        %v675 = vld [vmem:[%s3 + $0x328] sm:$0xff]
        %v676 = vld [vmem:[%s3 + $0x330] sm:$0xff]
        %v677 = vld [vmem:[%s3 + $0x338] sm:$0xff]
        %v678 = vld [vmem:[%s3 + $0x340] sm:$0xff]
        %v679 = vld [vmem:[%s3 + $0x348] sm:$0xff]
        %v680 = vld [vmem:[%s3 + $0x350] sm:$0xff]
        %v681 = vld [vmem:[%s3 + $0x358] sm:$0xff]
        %v682 = vld [vmem:[%s3 + $0x360] sm:$0xff]
        %v683 = vld [vmem:[%s3 + $0x368] sm:$0xff]
        %v684 = vld [vmem:[%s3 + $0x370] sm:$0xff]
        %v685 = vld [vmem:[%s3 + $0x378] sm:$0xff]
        %v686 = vld [vmem:[%s3 + $0x380] sm:$0xff]
        %v687 = vld [vmem:[%s3 + $0x388] sm:$0xff]
        %v688 = vld [vmem:[%s3 + $0x390] sm:$0xff]
        %v689 = vld [vmem:[%s3 + $0x398] sm:$0xff]
        %v690 = vld [vmem:[%s3 + $0x3a0] sm:$0xff]
        %v691 = vld [vmem:[%s3 + $0x3a8] sm:$0xff]
        %v692 = vld [vmem:[%s3 + $0x3b0] sm:$0xff]
        %v693 = vld [vmem:[%s3 + $0x3b8] sm:$0xff]
        %v694 = vld [vmem:[%s3 + $0x3c0] sm:$0xff]
        %v695 = vld [vmem:[%s3 + $0x3c8] sm:$0xff]
        %v696 = vld [vmem:[%s3 + $0x3d0] sm:$0xff]
        %v697 = vld [vmem:[%s3 + $0x3d8] sm:$0xff]
        %v698 = vld [vmem:[%s3 + $0x3e0] sm:$0xff]
        %v699 = vld [vmem:[%s3 + $0x3e8] sm:$0xff]
        %v700 = vld [vmem:[%s3 + $0x3f0] sm:$0xff]
        %v701 = vld [vmem:[%s3 + $0x3f8] sm:$0xff]
        %v702 = vld [vmem:[%s4] sm:$0xff]
        %v703 = vld [vmem:[%s4 + $0x8] sm:$0xff]
        %v704 = vld [vmem:[%s4 + $0x10] sm:$0xff]
        %v705 = vld [vmem:[%s4 + $0x18] sm:$0xff]
        %v706 = vld [vmem:[%s4 + $0x20] sm:$0xff]
        %v707 = vld [vmem:[%s4 + $0x28] sm:$0xff]
        %v708 = vld [vmem:[%s4 + $0x30] sm:$0xff]
        %v709 = vld [vmem:[%s4 + $0x38] sm:$0xff]
        %v710 = vld [vmem:[%s4 + $0x40] sm:$0xff]
        %v711 = vld [vmem:[%s4 + $0x48] sm:$0xff]
        %v712 = vld [vmem:[%s4 + $0x50] sm:$0xff]
        %v713 = vld [vmem:[%s4 + $0x58] sm:$0xff]
        %v714 = vld [vmem:[%s4 + $0x60] sm:$0xff]
        %v715 = vld [vmem:[%s4 + $0x68] sm:$0xff]
        %v716 = vld [vmem:[%s4 + $0x70] sm:$0xff]
        %v717 = vld [vmem:[%s4 + $0x78] sm:$0xff]
        %v718 = vld [vmem:[%s4 + $0x80] sm:$0xff]
        %v719 = vld [vmem:[%s4 + $0x88] sm:$0xff]
        %v720 = vld [vmem:[%s4 + $0x90] sm:$0xff]
        %v721 = vld [vmem:[%s4 + $0x98] sm:$0xff]
        %v722 = vld [vmem:[%s4 + $0xa0] sm:$0xff]
        %v723 = vld [vmem:[%s4 + $0xa8] sm:$0xff]
        %v724 = vld [vmem:[%s4 + $0xb0] sm:$0xff]
        %v725 = vld [vmem:[%s4 + $0xb8] sm:$0xff]
        %v726 = vld [vmem:[%s4 + $0xc0] sm:$0xff]
        %v727 = vld [vmem:[%s4 + $0xc8] sm:$0xff]
        %v728 = vld [vmem:[%s4 + $0xd0] sm:$0xff]
        %v729 = vld [vmem:[%s4 + $0xd8] sm:$0xff]
        %v730 = vld [vmem:[%s4 + $0xe0] sm:$0xff]
        %v731 = vld [vmem:[%s4 + $0xe8] sm:$0xff]
        %v732 = vld [vmem:[%s4 + $0xf0] sm:$0xff]
        %v733 = vld [vmem:[%s4 + $0xf8] sm:$0xff]
        %734 = vmatpush.msra.mxu0 %v589
        %735 = vmatpush.msra.mxu0 %v588
        %736 = vmatpush.msra.mxu0 %v587
        %737 = vmatpush.msra.mxu0 %v586
        %738 = vmatpush.msra.mxu0 %v585
        %739 = vmatpush.msra.mxu0 %v584
        %740 = vmatpush.msra.mxu0 %v583
        %741 = vmatpush.msra.mxu0 %v582
        %742 = vmatpush.msra.mxu0 %v581
        %743 = vmatpush.msra.mxu0 %v580
        %744 = vmatpush.msra.mxu0 %v579
        %745 = vmatpush.msra.mxu0 %v578
        %746 = vmatpush.msra.mxu0 %v577
        %747 = vmatpush.msra.mxu0 %v576
        %748 = vmatpush.msra.mxu0 %v575
        %749 = vmatpush.msra.mxu0 %v574
        %750 = vmatmul.f32.gmra.mxu0 %v424
        %v751 = vpop.f32.mrf.mxu0
        %v752 = vadd.f32 0.0, %v751
        %753 = vdwg.mxu0
        %754 = vmatpush.msra.mxu0 %v605
        %755 = vmatpush.msra.mxu0 %v604
        %756 = vmatpush.msra.mxu0 %v603
        %757 = vmatpush.msra.mxu0 %v602
        %758 = vmatpush.msra.mxu0 %v601
        %759 = vmatpush.msra.mxu0 %v600
        %760 = vmatpush.msra.mxu0 %v599
        %761 = vmatpush.msra.mxu0 %v598
        %762 = vmatpush.msra.mxu0 %v597
        %763 = vmatpush.msra.mxu0 %v596
        %764 = vmatpush.msra.mxu0 %v595
        %765 = vmatpush.msra.mxu0 %v594
        %766 = vmatpush.msra.mxu0 %v593
        %767 = vmatpush.msra.mxu0 %v592
        %768 = vmatpush.msra.mxu0 %v591
        %769 = vmatpush.msra.mxu0 %v590
        %770 = vmatmul.f32.gmra.mxu0 %v444
        %v771 = vpop.f32.mrf.mxu0
        %v772 = vadd.f32 %v752, %v771
        %773 = vdwg.mxu0
        %774 = vmatpush.msra.mxu0 %v621
        %775 = vmatpush.msra.mxu0 %v620
        %776 = vmatpush.msra.mxu0 %v619
        %777 = vmatpush.msra.mxu0 %v618
        %778 = vmatpush.msra.mxu0 %v617
        %779 = vmatpush.msra.mxu0 %v616
        %780 = vmatpush.msra.mxu0 %v615
        %781 = vmatpush.msra.mxu0 %v614
        %782 = vmatpush.msra.mxu0 %v613
        %783 = vmatpush.msra.mxu0 %v612
        %784 = vmatpush.msra.mxu0 %v611
        %785 = vmatpush.msra.mxu0 %v610
        %786 = vmatpush.msra.mxu0 %v609
        %787 = vmatpush.msra.mxu0 %v608
        %788 = vmatpush.msra.mxu0 %v607
        %789 = vmatpush.msra.mxu0 %v606
        %790 = vmatmul.f32.gmra.mxu0 %v464
        %v791 = vpop.f32.mrf.mxu0
        %v792 = vadd.f32 %v772, %v791
        %793 = vdwg.mxu0
        %794 = vmatpush.msra.mxu0 %v637
        %795 = vmatpush.msra.mxu0 %v636
        %796 = vmatpush.msra.mxu0 %v635
        %797 = vmatpush.msra.mxu0 %v634
        %798 = vmatpush.msra.mxu0 %v633
        %799 = vmatpush.msra.mxu0 %v632
        %800 = vmatpush.msra.mxu0 %v631
        %801 = vmatpush.msra.mxu0 %v630
        %802 = vmatpush.msra.mxu0 %v629
        %803 = vmatpush.msra.mxu0 %v628
        %804 = vmatpush.msra.mxu0 %v627
        %805 = vmatpush.msra.mxu0 %v626
        %806 = vmatpush.msra.mxu0 %v625
        %807 = vmatpush.msra.mxu0 %v624
        %808 = vmatpush.msra.mxu0 %v623
        %809 = vmatpush.msra.mxu0 %v622
        %810 = vmatmul.f32.gmra.mxu0 %v484
        %v811 = vpop.f32.mrf.mxu0
        %v812 = vadd.f32 %v792, %v811
        %813 = vdwg.mxu0
        %814 = vmatpush.msra.mxu0 %v653
        %815 = vmatpush.msra.mxu0 %v652
        %816 = vmatpush.msra.mxu0 %v651
        %817 = vmatpush.msra.mxu0 %v650
        %818 = vmatpush.msra.mxu0 %v649
        %819 = vmatpush.msra.mxu0 %v648
        %820 = vmatpush.msra.mxu0 %v647
        %821 = vmatpush.msra.mxu0 %v646
        %822 = vmatpush.msra.mxu0 %v645
        %823 = vmatpush.msra.mxu0 %v644
        %824 = vmatpush.msra.mxu0 %v643
        %825 = vmatpush.msra.mxu0 %v642
        %826 = vmatpush.msra.mxu0 %v641
        %827 = vmatpush.msra.mxu0 %v640
        %828 = vmatpush.msra.mxu0 %v639
        %829 = vmatpush.msra.mxu0 %v638
        %830 = vmatmul.f32.gmra.mxu0 %v504
        %v831 = vpop.f32.mrf.mxu0
        %v832 = vadd.f32 %v812, %v831
        %833 = vdwg.mxu0
        %834 = vmatpush.msra.mxu0 %v669
        %835 = vmatpush.msra.mxu0 %v668
        %836 = vmatpush.msra.mxu0 %v667
        %837 = vmatpush.msra.mxu0 %v666
        %838 = vmatpush.msra.mxu0 %v665
        %839 = vmatpush.msra.mxu0 %v664
        %840 = vmatpush.msra.mxu0 %v663
        %841 = vmatpush.msra.mxu0 %v662
        %842 = vmatpush.msra.mxu0 %v661
        %843 = vmatpush.msra.mxu0 %v660
        %844 = vmatpush.msra.mxu0 %v659
        %845 = vmatpush.msra.mxu0 %v658
        %846 = vmatpush.msra.mxu0 %v657
        %847 = vmatpush.msra.mxu0 %v656
        %848 = vmatpush.msra.mxu0 %v655
        %849 = vmatpush.msra.mxu0 %v654
        %850 = vmatmul.f32.gmra.mxu0 %v524
        %v851 = vpop.f32.mrf.mxu0
        %v852 = vadd.f32 %v832, %v851
        %853 = vdwg.mxu0
        %854 = vmatpush.msra.mxu0 %v685
        %855 = vmatpush.msra.mxu0 %v684
        %856 = vmatpush.msra.mxu0 %v683
        %857 = vmatpush.msra.mxu0 %v682
        %858 = vmatpush.msra.mxu0 %v681
        %859 = vmatpush.msra.mxu0 %v680
        %860 = vmatpush.msra.mxu0 %v679
        %861 = vmatpush.msra.mxu0 %v678
        %862 = vmatpush.msra.mxu0 %v677
        %863 = vmatpush.msra.mxu0 %v676
        %864 = vmatpush.msra.mxu0 %v675
        %865 = vmatpush.msra.mxu0 %v674
        %866 = vmatpush.msra.mxu0 %v673
        %867 = vmatpush.msra.mxu0 %v672
        %868 = vmatpush.msra.mxu0 %v671
        %869 = vmatpush.msra.mxu0 %v670
        %870 = vmatmul.f32.gmra.mxu0 %v544
        %v871 = vpop.f32.mrf.mxu0
        %v872 = vadd.f32 %v852, %v871
        %873 = vdwg.mxu0
        %874 = vmatpush.msra.mxu0 %v701
        %875 = vmatpush.msra.mxu0 %v700
        %876 = vmatpush.msra.mxu0 %v699
        %877 = vmatpush.msra.mxu0 %v698
        %878 = vmatpush.msra.mxu0 %v697
        %879 = vmatpush.msra.mxu0 %v696
        %880 = vmatpush.msra.mxu0 %v695
        %881 = vmatpush.msra.mxu0 %v694
        %882 = vmatpush.msra.mxu0 %v693
        %883 = vmatpush.msra.mxu0 %v692
        %884 = vmatpush.msra.mxu0 %v691
        %885 = vmatpush.msra.mxu0 %v690
        %886 = vmatpush.msra.mxu0 %v689
        %887 = vmatpush.msra.mxu0 %v688
        %888 = vmatpush.msra.mxu0 %v687
        %889 = vmatpush.msra.mxu0 %v686
        %890 = vmatmul.f32.gmra.mxu0 %v564
        %v891 = vpop.f32.mrf.mxu0
        %v892 = vadd.f32 %v872, %v891
        %893 = vdwg.mxu0
        %vm894 = vcmask 261120
        %v896 = vsel %vm894, %v892, 0
        %898 = vmatpush.msra.mxu0 0.0
        %899 = vmatpush.msra.mxu0 0.0
        %900 = vmatpush.msra.mxu0 0.0
        %901 = vmatpush.msra.mxu0 0.0
        %902 = vmatpush.msra.mxu0 0.0
        %903 = vmatpush.msra.mxu0 0.0
        %904 = vmatpush.msra.mxu0 0.0
        %905 = vmatpush.msra.mxu0 0.0
        %906 = vmatpush.msra.mxu0 0.0
        %907 = vmatpush.msra.mxu0 0.0
        %908 = vmatpush.msra.mxu0 0.0
        %909 = vmatpush.msra.mxu0 0.0
        %910 = vmatpush.msra.mxu0 %v726
        %911 = vmatpush.msra.mxu0 %v718
        %912 = vmatpush.msra.mxu0 %v710
        %913 = vmatpush.msra.mxu0 %v702
        %914 = vmatmul.f32.gmra.mxu0 %v896
        %v915 = vpop.f32.mrf.mxu0
        %v916 = vadd.f32 0.0, %v915
        %917 = vdwg.mxu0
        %918 = vmatpush.msra.mxu0 0.0
        %919 = vmatpush.msra.mxu0 0.0
        %920 = vmatpush.msra.mxu0 0.0
        %921 = vmatpush.msra.mxu0 0.0
        %922 = vmatpush.msra.mxu0 0.0
        %923 = vmatpush.msra.mxu0 0.0
        %924 = vmatpush.msra.mxu0 0.0
        %925 = vmatpush.msra.mxu0 0.0
        %926 = vmatpush.msra.mxu0 0.0
        %927 = vmatpush.msra.mxu0 0.0
        %928 = vmatpush.msra.mxu0 0.0
        %929 = vmatpush.msra.mxu0 0.0
        %930 = vmatpush.msra.mxu0 %v727
        %931 = vmatpush.msra.mxu0 %v719
        %932 = vmatpush.msra.mxu0 %v711
        %933 = vmatpush.msra.mxu0 %v703
        %934 = vmatmul.f32.gmra.mxu0 %v896
        %v935 = vpop.f32.mrf.mxu0
        %v936 = vadd.f32 0.0, %v935
        %937 = vdwg.mxu0
        %938 = vmatpush.msra.mxu0 0.0
        %939 = vmatpush.msra.mxu0 0.0
        %940 = vmatpush.msra.mxu0 0.0
        %941 = vmatpush.msra.mxu0 0.0
        %942 = vmatpush.msra.mxu0 0.0
        %943 = vmatpush.msra.mxu0 0.0
        %944 = vmatpush.msra.mxu0 0.0
        %945 = vmatpush.msra.mxu0 0.0
        %946 = vmatpush.msra.mxu0 0.0
        %947 = vmatpush.msra.mxu0 0.0
        %948 = vmatpush.msra.mxu0 0.0
        %949 = vmatpush.msra.mxu0 0.0
        %950 = vmatpush.msra.mxu0 %v728
        %951 = vmatpush.msra.mxu0 %v720
        %952 = vmatpush.msra.mxu0 %v712
        %953 = vmatpush.msra.mxu0 %v704
        %954 = vmatmul.f32.gmra.mxu0 %v896
        %v955 = vpop.f32.mrf.mxu0
        %v956 = vadd.f32 0.0, %v955
        %957 = vdwg.mxu0
        %958 = vmatpush.msra.mxu0 0.0
        %959 = vmatpush.msra.mxu0 0.0
        %960 = vmatpush.msra.mxu0 0.0
        %961 = vmatpush.msra.mxu0 0.0
        %962 = vmatpush.msra.mxu0 0.0
        %963 = vmatpush.msra.mxu0 0.0
        %964 = vmatpush.msra.mxu0 0.0
        %965 = vmatpush.msra.mxu0 0.0
        %966 = vmatpush.msra.mxu0 0.0
        %967 = vmatpush.msra.mxu0 0.0
        %968 = vmatpush.msra.mxu0 0.0
        %969 = vmatpush.msra.mxu0 0.0
        %970 = vmatpush.msra.mxu0 %v729
        %971 = vmatpush.msra.mxu0 %v721
        %972 = vmatpush.msra.mxu0 %v713
        %973 = vmatpush.msra.mxu0 %v705
        %974 = vmatmul.f32.gmra.mxu0 %v896
        %v975 = vpop.f32.mrf.mxu0
        %v976 = vadd.f32 0.0, %v975
        %977 = vdwg.mxu0
        %978 = vmatpush.msra.mxu0 0.0
        %979 = vmatpush.msra.mxu0 0.0
        %980 = vmatpush.msra.mxu0 0.0
        %981 = vmatpush.msra.mxu0 0.0
        %982 = vmatpush.msra.mxu0 0.0
        %983 = vmatpush.msra.mxu0 0.0
        %984 = vmatpush.msra.mxu0 0.0
        %985 = vmatpush.msra.mxu0 0.0
        %986 = vmatpush.msra.mxu0 0.0
        %987 = vmatpush.msra.mxu0 0.0
        %988 = vmatpush.msra.mxu0 0.0
        %989 = vmatpush.msra.mxu0 0.0
        %990 = vmatpush.msra.mxu0 %v730
        %991 = vmatpush.msra.mxu0 %v722
        %992 = vmatpush.msra.mxu0 %v714
        %993 = vmatpush.msra.mxu0 %v706
        %994 = vmatmul.f32.gmra.mxu0 %v896
        %v995 = vpop.f32.mrf.mxu0
        %v996 = vadd.f32 0.0, %v995
        %997 = vdwg.mxu0
        %998 = vmatpush.msra.mxu0 0.0
        %999 = vmatpush.msra.mxu0 0.0
        %1000 = vmatpush.msra.mxu0 0.0
        %1001 = vmatpush.msra.mxu0 0.0
        %1002 = vmatpush.msra.mxu0 0.0
        %1003 = vmatpush.msra.mxu0 0.0
        %1004 = vmatpush.msra.mxu0 0.0
        %1005 = vmatpush.msra.mxu0 0.0
        %1006 = vmatpush.msra.mxu0 0.0
        %1007 = vmatpush.msra.mxu0 0.0
        %1008 = vmatpush.msra.mxu0 0.0
        %1009 = vmatpush.msra.mxu0 0.0
        %1010 = vmatpush.msra.mxu0 %v731
        %1011 = vmatpush.msra.mxu0 %v723
        %1012 = vmatpush.msra.mxu0 %v715
        %1013 = vmatpush.msra.mxu0 %v707
        %1014 = vmatmul.f32.gmra.mxu0 %v896
        %v1015 = vpop.f32.mrf.mxu0
        %v1016 = vadd.f32 0.0, %v1015
        %1017 = vdwg.mxu0
        %1018 = vmatpush.msra.mxu0 0.0
        %1019 = vmatpush.msra.mxu0 0.0
        %1020 = vmatpush.msra.mxu0 0.0
        %1021 = vmatpush.msra.mxu0 0.0
        %1022 = vmatpush.msra.mxu0 0.0
        %1023 = vmatpush.msra.mxu0 0.0
        %1024 = vmatpush.msra.mxu0 0.0
        %1025 = vmatpush.msra.mxu0 0.0
        %1026 = vmatpush.msra.mxu0 0.0
        %1027 = vmatpush.msra.mxu0 0.0
        %1028 = vmatpush.msra.mxu0 0.0
        %1029 = vmatpush.msra.mxu0 0.0
        %1030 = vmatpush.msra.mxu0 %v732
        %1031 = vmatpush.msra.mxu0 %v724
        %1032 = vmatpush.msra.mxu0 %v716
        %1033 = vmatpush.msra.mxu0 %v708
        %1034 = vmatmul.f32.gmra.mxu0 %v896
        %v1035 = vpop.f32.mrf.mxu0
        %v1036 = vadd.f32 0.0, %v1035
        %1037 = vdwg.mxu0
        %1038 = vmatpush.msra.mxu0 0.0
        %1039 = vmatpush.msra.mxu0 0.0
        %1040 = vmatpush.msra.mxu0 0.0
        %1041 = vmatpush.msra.mxu0 0.0
        %1042 = vmatpush.msra.mxu0 0.0
        %1043 = vmatpush.msra.mxu0 0.0
        %1044 = vmatpush.msra.mxu0 0.0
        %1045 = vmatpush.msra.mxu0 0.0
        %1046 = vmatpush.msra.mxu0 0.0
        %1047 = vmatpush.msra.mxu0 0.0
        %1048 = vmatpush.msra.mxu0 0.0
        %1049 = vmatpush.msra.mxu0 0.0
        %1050 = vmatpush.msra.mxu0 %v733
        %1051 = vmatpush.msra.mxu0 %v725
        %1052 = vmatpush.msra.mxu0 %v717
        %1053 = vmatpush.msra.mxu0 %v709
        %1054 = vmatmul.f32.gmra.mxu0 %v896
        %v1055 = vpop.f32.mrf.mxu0
        %v1056 = vadd.f32 0.0, %v1055
        %1057 = vdwg.mxu0
        %v1058 = vsub.f32 %v424, %v916
        %v1059 = vsub.f32 %v444, %v936
        %v1060 = vsub.f32 %v464, %v956
        %v1061 = vsub.f32 %v484, %v976
        %v1062 = vsub.f32 %v504, %v996
        %v1063 = vsub.f32 %v524, %v1016
        %v1064 = vsub.f32 %v544, %v1036
        %v1065 = vsub.f32 %v564, %v1056
        %v1066 = vmul.f32 %v1058, %v1058
        %v1067 = vmul.f32 %v1059, %v1059
        %v1068 = vmul.f32 %v1060, %v1060
        %v1069 = vmul.f32 %v1061, %v1061
        %v1070 = vmul.f32 %v1062, %v1062
        %v1071 = vmul.f32 %v1063, %v1063
        %v1072 = vmul.f32 %v1064, %v1064
        %v1073 = vmul.f32 %v1065, %v1065
        %1074 = vmatpush.msra.mxu0 %v589
        %1075 = vmatpush.msra.mxu0 %v588
        %1076 = vmatpush.msra.mxu0 %v587
        %1077 = vmatpush.msra.mxu0 %v586
        %1078 = vmatpush.msra.mxu0 %v585
        %1079 = vmatpush.msra.mxu0 %v584
        %1080 = vmatpush.msra.mxu0 %v583
        %1081 = vmatpush.msra.mxu0 %v582
        %1082 = vmatpush.msra.mxu0 %v581
        %1083 = vmatpush.msra.mxu0 %v580
        %1084 = vmatpush.msra.mxu0 %v579
        %1085 = vmatpush.msra.mxu0 %v578
        %1086 = vmatpush.msra.mxu0 %v577
        %1087 = vmatpush.msra.mxu0 %v576
        %1088 = vmatpush.msra.mxu0 %v575
        %1089 = vmatpush.msra.mxu0 %v574
        %1090 = vmatmul.f32.gmra.mxu0 %v1066
        %v1091 = vpop.f32.mrf.mxu0
        %v1092 = vadd.f32 1e-05, %v1091
        %1093 = vdwg.mxu0
        %1094 = vmatpush.msra.mxu0 %v605
        %1095 = vmatpush.msra.mxu0 %v604
        %1096 = vmatpush.msra.mxu0 %v603
        %1097 = vmatpush.msra.mxu0 %v602
        %1098 = vmatpush.msra.mxu0 %v601
        %1099 = vmatpush.msra.mxu0 %v600
        %1100 = vmatpush.msra.mxu0 %v599
        %1101 = vmatpush.msra.mxu0 %v598
        %1102 = vmatpush.msra.mxu0 %v597
        %1103 = vmatpush.msra.mxu0 %v596
        %1104 = vmatpush.msra.mxu0 %v595
        %1105 = vmatpush.msra.mxu0 %v594
        %1106 = vmatpush.msra.mxu0 %v593
        %1107 = vmatpush.msra.mxu0 %v592
        %1108 = vmatpush.msra.mxu0 %v591
        %1109 = vmatpush.msra.mxu0 %v590
        %1110 = vmatmul.f32.gmra.mxu0 %v1067
        %v1111 = vpop.f32.mrf.mxu0
        %v1112 = vadd.f32 %v1092, %v1111
        %1113 = vdwg.mxu0
        %1114 = vmatpush.msra.mxu0 %v621
        %1115 = vmatpush.msra.mxu0 %v620
        %1116 = vmatpush.msra.mxu0 %v619
        %1117 = vmatpush.msra.mxu0 %v618
        %1118 = vmatpush.msra.mxu0 %v617
        %1119 = vmatpush.msra.mxu0 %v616
        %1120 = vmatpush.msra.mxu0 %v615
        %1121 = vmatpush.msra.mxu0 %v614
        %1122 = vmatpush.msra.mxu0 %v613
        %1123 = vmatpush.msra.mxu0 %v612
        %1124 = vmatpush.msra.mxu0 %v611
        %1125 = vmatpush.msra.mxu0 %v610
        %1126 = vmatpush.msra.mxu0 %v609
        %1127 = vmatpush.msra.mxu0 %v608
        %1128 = vmatpush.msra.mxu0 %v607
        %1129 = vmatpush.msra.mxu0 %v606
        %1130 = vmatmul.f32.gmra.mxu0 %v1068
        %v1131 = vpop.f32.mrf.mxu0
        %v1132 = vadd.f32 %v1112, %v1131
        %1133 = vdwg.mxu0
        %1134 = vmatpush.msra.mxu0 %v637
        %1135 = vmatpush.msra.mxu0 %v636
        %1136 = vmatpush.msra.mxu0 %v635
        %1137 = vmatpush.msra.mxu0 %v634
        %1138 = vmatpush.msra.mxu0 %v633
        %1139 = vmatpush.msra.mxu0 %v632
        %1140 = vmatpush.msra.mxu0 %v631
        %1141 = vmatpush.msra.mxu0 %v630
        %1142 = vmatpush.msra.mxu0 %v629
        %1143 = vmatpush.msra.mxu0 %v628
        %1144 = vmatpush.msra.mxu0 %v627
        %1145 = vmatpush.msra.mxu0 %v626
        %1146 = vmatpush.msra.mxu0 %v625
        %1147 = vmatpush.msra.mxu0 %v624
        %1148 = vmatpush.msra.mxu0 %v623
        %1149 = vmatpush.msra.mxu0 %v622
        %1150 = vmatmul.f32.gmra.mxu0 %v1069
        %v1151 = vpop.f32.mrf.mxu0
        %v1152 = vadd.f32 %v1132, %v1151
        %1153 = vdwg.mxu0
        %1154 = vmatpush.msra.mxu0 %v653
        %1155 = vmatpush.msra.mxu0 %v652
        %1156 = vmatpush.msra.mxu0 %v651
        %1157 = vmatpush.msra.mxu0 %v650
        %1158 = vmatpush.msra.mxu0 %v649
        %1159 = vmatpush.msra.mxu0 %v648
        %1160 = vmatpush.msra.mxu0 %v647
        %1161 = vmatpush.msra.mxu0 %v646
        %1162 = vmatpush.msra.mxu0 %v645
        %1163 = vmatpush.msra.mxu0 %v644
        %1164 = vmatpush.msra.mxu0 %v643
        %1165 = vmatpush.msra.mxu0 %v642
        %1166 = vmatpush.msra.mxu0 %v641
        %1167 = vmatpush.msra.mxu0 %v640
        %1168 = vmatpush.msra.mxu0 %v639
        %1169 = vmatpush.msra.mxu0 %v638
        %1170 = vmatmul.f32.gmra.mxu0 %v1070
        %v1171 = vpop.f32.mrf.mxu0
        %v1172 = vadd.f32 %v1152, %v1171
        %1173 = vdwg.mxu0
        %1174 = vmatpush.msra.mxu0 %v669
        %1175 = vmatpush.msra.mxu0 %v668
        %1176 = vmatpush.msra.mxu0 %v667
        %1177 = vmatpush.msra.mxu0 %v666
        %1178 = vmatpush.msra.mxu0 %v665
        %1179 = vmatpush.msra.mxu0 %v664
        %1180 = vmatpush.msra.mxu0 %v663
        %1181 = vmatpush.msra.mxu0 %v662
        %1182 = vmatpush.msra.mxu0 %v661
        %1183 = vmatpush.msra.mxu0 %v660
        %1184 = vmatpush.msra.mxu0 %v659
        %1185 = vmatpush.msra.mxu0 %v658
        %1186 = vmatpush.msra.mxu0 %v657
        %1187 = vmatpush.msra.mxu0 %v656
        %1188 = vmatpush.msra.mxu0 %v655
        %1189 = vmatpush.msra.mxu0 %v654
        %1190 = vmatmul.f32.gmra.mxu0 %v1071
        %v1191 = vpop.f32.mrf.mxu0
        %v1192 = vadd.f32 %v1172, %v1191
        %1193 = vdwg.mxu0
        %1194 = vmatpush.msra.mxu0 %v685
        %1195 = vmatpush.msra.mxu0 %v684
        %1196 = vmatpush.msra.mxu0 %v683
        %1197 = vmatpush.msra.mxu0 %v682
        %1198 = vmatpush.msra.mxu0 %v681
        %1199 = vmatpush.msra.mxu0 %v680
        %1200 = vmatpush.msra.mxu0 %v679
        %1201 = vmatpush.msra.mxu0 %v678
        %1202 = vmatpush.msra.mxu0 %v677
        %1203 = vmatpush.msra.mxu0 %v676
        %1204 = vmatpush.msra.mxu0 %v675
        %1205 = vmatpush.msra.mxu0 %v674
        %1206 = vmatpush.msra.mxu0 %v673
        %1207 = vmatpush.msra.mxu0 %v672
        %1208 = vmatpush.msra.mxu0 %v671
        %1209 = vmatpush.msra.mxu0 %v670
        %1210 = vmatmul.f32.gmra.mxu0 %v1072
        %v1211 = vpop.f32.mrf.mxu0
        %v1212 = vadd.f32 %v1192, %v1211
        %1213 = vdwg.mxu0
        %1214 = vmatpush.msra.mxu0 %v701
        %1215 = vmatpush.msra.mxu0 %v700
        %1216 = vmatpush.msra.mxu0 %v699
        %1217 = vmatpush.msra.mxu0 %v698
        %1218 = vmatpush.msra.mxu0 %v697
        %1219 = vmatpush.msra.mxu0 %v696
        %1220 = vmatpush.msra.mxu0 %v695
        %1221 = vmatpush.msra.mxu0 %v694
        %1222 = vmatpush.msra.mxu0 %v693
        %1223 = vmatpush.msra.mxu0 %v692
        %1224 = vmatpush.msra.mxu0 %v691
        %1225 = vmatpush.msra.mxu0 %v690
        %1226 = vmatpush.msra.mxu0 %v689
        %1227 = vmatpush.msra.mxu0 %v688
        %1228 = vmatpush.msra.mxu0 %v687
        %1229 = vmatpush.msra.mxu0 %v686
        %1230 = vmatmul.f32.gmra.mxu0 %v1073
        %v1231 = vpop.f32.mrf.mxu0
        %v1232 = vadd.f32 %v1212, %v1231
        %1233 = vdwg.mxu0
        %v1234 = vrsqrt.pop %v1232
        %v1235 = vmul.f32 %v1234, %v1232
        %v1236 = vmul.f32 %v1235, %v1234
        %v1237 = vmul.f32 0.5, %v1236
        %v1238 = vsub.f32 1.5, %v1237
        %v1239 = vmul.f32 %v1234, %v1238
        %vm1240 = vweird.f32 %v1232
        %vm1241 = vweird.f32 %v1234
        %vm1242 = vmor %vm1240, %vm1241
        %v1243 = vsel %vm1242, %v1234, %v1239
        %v1245 = vsel %vm894, %v1243, 0
        %1247 = vmatpush.msra.mxu0 0.0
        %1248 = vmatpush.msra.mxu0 0.0
        %1249 = vmatpush.msra.mxu0 0.0
        %1250 = vmatpush.msra.mxu0 0.0
        %1251 = vmatpush.msra.mxu0 0.0
        %1252 = vmatpush.msra.mxu0 0.0
        %1253 = vmatpush.msra.mxu0 0.0
        %1254 = vmatpush.msra.mxu0 0.0
        %1255 = vmatpush.msra.mxu0 0.0
        %1256 = vmatpush.msra.mxu0 0.0
        %1257 = vmatpush.msra.mxu0 0.0
        %1258 = vmatpush.msra.mxu0 0.0
        %1259 = vmatpush.msra.mxu0 %v726
        %1260 = vmatpush.msra.mxu0 %v718
        %1261 = vmatpush.msra.mxu0 %v710
        %1262 = vmatpush.msra.mxu0 %v702
        %1263 = vmatmul.f32.gmra.mxu0 %v1245
        %v1264 = vpop.f32.mrf.mxu0
        %v1265 = vadd.f32 0.0, %v1264
        %1266 = vdwg.mxu0
        %1267 = vmatpush.msra.mxu0 0.0
        %1268 = vmatpush.msra.mxu0 0.0
        %1269 = vmatpush.msra.mxu0 0.0
        %1270 = vmatpush.msra.mxu0 0.0
        %1271 = vmatpush.msra.mxu0 0.0
        %1272 = vmatpush.msra.mxu0 0.0
        %1273 = vmatpush.msra.mxu0 0.0
        %1274 = vmatpush.msra.mxu0 0.0
        %1275 = vmatpush.msra.mxu0 0.0
        %1276 = vmatpush.msra.mxu0 0.0
        %1277 = vmatpush.msra.mxu0 0.0
        %1278 = vmatpush.msra.mxu0 0.0
        %1279 = vmatpush.msra.mxu0 %v727
        %1280 = vmatpush.msra.mxu0 %v719
        %1281 = vmatpush.msra.mxu0 %v711
        %1282 = vmatpush.msra.mxu0 %v703
        %1283 = vmatmul.f32.gmra.mxu0 %v1245
        %v1284 = vpop.f32.mrf.mxu0
        %v1285 = vadd.f32 0.0, %v1284
        %1286 = vdwg.mxu0
        %1287 = vmatpush.msra.mxu0 0.0
        %1288 = vmatpush.msra.mxu0 0.0
        %1289 = vmatpush.msra.mxu0 0.0
        %1290 = vmatpush.msra.mxu0 0.0
        %1291 = vmatpush.msra.mxu0 0.0
        %1292 = vmatpush.msra.mxu0 0.0
        %1293 = vmatpush.msra.mxu0 0.0
        %1294 = vmatpush.msra.mxu0 0.0
        %1295 = vmatpush.msra.mxu0 0.0
        %1296 = vmatpush.msra.mxu0 0.0
        %1297 = vmatpush.msra.mxu0 0.0
        %1298 = vmatpush.msra.mxu0 0.0
        %1299 = vmatpush.msra.mxu0 %v728
        %1300 = vmatpush.msra.mxu0 %v720
        %1301 = vmatpush.msra.mxu0 %v712
        %1302 = vmatpush.msra.mxu0 %v704
        %1303 = vmatmul.f32.gmra.mxu0 %v1245
        %v1304 = vpop.f32.mrf.mxu0
        %v1305 = vadd.f32 0.0, %v1304
        %1306 = vdwg.mxu0
        %1307 = vmatpush.msra.mxu0 0.0
        %1308 = vmatpush.msra.mxu0 0.0
        %1309 = vmatpush.msra.mxu0 0.0
        %1310 = vmatpush.msra.mxu0 0.0
        %1311 = vmatpush.msra.mxu0 0.0
        %1312 = vmatpush.msra.mxu0 0.0
        %1313 = vmatpush.msra.mxu0 0.0
        %1314 = vmatpush.msra.mxu0 0.0
        %1315 = vmatpush.msra.mxu0 0.0
        %1316 = vmatpush.msra.mxu0 0.0
        %1317 = vmatpush.msra.mxu0 0.0
        %1318 = vmatpush.msra.mxu0 0.0
        %1319 = vmatpush.msra.mxu0 %v729
        %1320 = vmatpush.msra.mxu0 %v721
        %1321 = vmatpush.msra.mxu0 %v713
        %1322 = vmatpush.msra.mxu0 %v705
        %1323 = vmatmul.f32.gmra.mxu0 %v1245
        %v1324 = vpop.f32.mrf.mxu0
        %v1325 = vadd.f32 0.0, %v1324
        %1326 = vdwg.mxu0
        %1327 = vmatpush.msra.mxu0 0.0
        %1328 = vmatpush.msra.mxu0 0.0
        %1329 = vmatpush.msra.mxu0 0.0
        %1330 = vmatpush.msra.mxu0 0.0
        %1331 = vmatpush.msra.mxu0 0.0
        %1332 = vmatpush.msra.mxu0 0.0
        %1333 = vmatpush.msra.mxu0 0.0
        %1334 = vmatpush.msra.mxu0 0.0
        %1335 = vmatpush.msra.mxu0 0.0
        %1336 = vmatpush.msra.mxu0 0.0
        %1337 = vmatpush.msra.mxu0 0.0
        %1338 = vmatpush.msra.mxu0 0.0
        %1339 = vmatpush.msra.mxu0 %v730
        %1340 = vmatpush.msra.mxu0 %v722
        %1341 = vmatpush.msra.mxu0 %v714
        %1342 = vmatpush.msra.mxu0 %v706
        %1343 = vmatmul.f32.gmra.mxu0 %v1245
        %v1344 = vpop.f32.mrf.mxu0
        %v1345 = vadd.f32 0.0, %v1344
        %1346 = vdwg.mxu0
        %1347 = vmatpush.msra.mxu0 0.0
        %1348 = vmatpush.msra.mxu0 0.0
        %1349 = vmatpush.msra.mxu0 0.0
        %1350 = vmatpush.msra.mxu0 0.0
        %1351 = vmatpush.msra.mxu0 0.0
        %1352 = vmatpush.msra.mxu0 0.0
        %1353 = vmatpush.msra.mxu0 0.0
        %1354 = vmatpush.msra.mxu0 0.0
        %1355 = vmatpush.msra.mxu0 0.0
        %1356 = vmatpush.msra.mxu0 0.0
        %1357 = vmatpush.msra.mxu0 0.0
        %1358 = vmatpush.msra.mxu0 0.0
        %1359 = vmatpush.msra.mxu0 %v731
        %1360 = vmatpush.msra.mxu0 %v723
        %1361 = vmatpush.msra.mxu0 %v715
        %1362 = vmatpush.msra.mxu0 %v707
        %1363 = vmatmul.f32.gmra.mxu0 %v1245
        %v1364 = vpop.f32.mrf.mxu0
        %v1365 = vadd.f32 0.0, %v1364
        %1366 = vdwg.mxu0
        %1367 = vmatpush.msra.mxu0 0.0
        %1368 = vmatpush.msra.mxu0 0.0
        %1369 = vmatpush.msra.mxu0 0.0
        %1370 = vmatpush.msra.mxu0 0.0
        %1371 = vmatpush.msra.mxu0 0.0
        %1372 = vmatpush.msra.mxu0 0.0
        %1373 = vmatpush.msra.mxu0 0.0
        %1374 = vmatpush.msra.mxu0 0.0
        %1375 = vmatpush.msra.mxu0 0.0
        %1376 = vmatpush.msra.mxu0 0.0
        %1377 = vmatpush.msra.mxu0 0.0
        %1378 = vmatpush.msra.mxu0 0.0
        %1379 = vmatpush.msra.mxu0 %v732
        %1380 = vmatpush.msra.mxu0 %v724
        %1381 = vmatpush.msra.mxu0 %v716
        %1382 = vmatpush.msra.mxu0 %v708
        %1383 = vmatmul.f32.gmra.mxu0 %v1245
        %v1384 = vpop.f32.mrf.mxu0
        %v1385 = vadd.f32 0.0, %v1384
        %1386 = vdwg.mxu0
        %1387 = vmatpush.msra.mxu0 0.0
        %1388 = vmatpush.msra.mxu0 0.0
        %1389 = vmatpush.msra.mxu0 0.0
        %1390 = vmatpush.msra.mxu0 0.0
        %1391 = vmatpush.msra.mxu0 0.0
        %1392 = vmatpush.msra.mxu0 0.0
        %1393 = vmatpush.msra.mxu0 0.0
        %1394 = vmatpush.msra.mxu0 0.0
        %1395 = vmatpush.msra.mxu0 0.0
        %1396 = vmatpush.msra.mxu0 0.0
        %1397 = vmatpush.msra.mxu0 0.0
        %1398 = vmatpush.msra.mxu0 0.0
        %1399 = vmatpush.msra.mxu0 %v733
        %1400 = vmatpush.msra.mxu0 %v725
        %1401 = vmatpush.msra.mxu0 %v717
        %1402 = vmatpush.msra.mxu0 %v709
        %1403 = vmatmul.f32.gmra.mxu0 %v1245
        %v1404 = vpop.f32.mrf.mxu0
        %v1405 = vadd.f32 0.0, %v1404
        %1406 = vdwg.mxu0
        %v1407 = vmul.f32 %v1058, %v1265
        %v1408 = vmul.f32 %v1059, %v1285
        %v1409 = vmul.f32 %v1060, %v1305
        %v1410 = vmul.f32 %v1061, %v1325
        %v1411 = vmul.f32 %v1062, %v1345
        %v1412 = vmul.f32 %v1063, %v1365
        %v1413 = vmul.f32 %v1064, %v1385
        %v1414 = vmul.f32 %v1065, %v1405
        %v1416 = vperm.slane %v569, 0
        %v1417 = vperm.slane %v569, 1
        %v1418 = vperm.slane %v569, 2
        %v1419 = vperm.slane %v569, 3
        %v1420 = vperm.slane %v569, 4
        %v1421 = vperm.slane %v569, 5
        %v1422 = vperm.slane %v569, 6
        %v1423 = vperm.slane %v569, 7
        %v1432 = vmul.f32 %v1407, %v1416
        %v1433 = vmul.f32 %v1408, %v1417
        %v1434 = vmul.f32 %v1409, %v1418
        %v1435 = vmul.f32 %v1410, %v1419
        %v1436 = vmul.f32 %v1411, %v1420
        %v1437 = vmul.f32 %v1412, %v1421
        %v1438 = vmul.f32 %v1413, %v1422
        %v1439 = vmul.f32 %v1414, %v1423
        %v1441 = vperm.slane %v573, 0
        %v1442 = vperm.slane %v573, 1
        %v1443 = vperm.slane %v573, 2
        %v1444 = vperm.slane %v573, 3
        %v1445 = vperm.slane %v573, 4
        %v1446 = vperm.slane %v573, 5
        %v1447 = vperm.slane %v573, 6
        %v1448 = vperm.slane %v573, 7
        %v1457 = vadd.f32 %v1432, %v1441
        %v1458 = vadd.f32 %v1433, %v1442
        %v1459 = vadd.f32 %v1434, %v1443
        %v1460 = vadd.f32 %v1435, %v1444
        %v1461 = vadd.f32 %v1436, %v1445
        %v1462 = vadd.f32 %v1437, %v1446
        %v1463 = vadd.f32 %v1438, %v1447
        %v1464 = vadd.f32 %v1439, %v1448
        %v1465 = vmax.f32 %v1457, 0.0
        %v1466 = vmax.f32 %v1458, 0.0
        %v1467 = vmax.f32 %v1459, 0.0
        %v1468 = vmax.f32 %v1460, 0.0
        %v1469 = vmax.f32 %v1461, 0.0
        %v1470 = vmax.f32 %v1462, 0.0
        %v1471 = vmax.f32 %v1463, 0.0
        %v1472 = vmax.f32 %v1464, 0.0
        %1473 = vst [vmem:[%s256] sm:$0xff] %v1465
        %1474 = vst [vmem:[%s256 + $0x8] sm:$0xff] %v1466
        %1475 = vst [vmem:[%s256 + $0x10] sm:$0xff] %v1467
        %1476 = vst [vmem:[%s256 + $0x18] sm:$0xff] %v1468
        %1477 = vst [vmem:[%s256 + $0x20] sm:$0xff] %v1469
        %1478 = vst [vmem:[%s256 + $0x28] sm:$0xff] %v1470
        %1479 = vst [vmem:[%s256 + $0x30] sm:$0xff] %v1471
        %1480 = vst [vmem:[%s256 + $0x38] sm:$0xff] %v1472
        %s1481 = sand.u32 %s141, 1
        %s1482 = scalar_lea.sflag [#allocation4], %s1481
        %s1483 = sand.u32 %s141, 1
        %s1484 = smul.addr %s1483, 64
        %s1485 = scalar_lea.vmem [#allocation7], %s1484
        // Predicated region
        $region49: #{tpu_custom_call.1} parent=39 // pred_check
          %p1486 = pneg %p151
        $region50: #{tpu_custom_call.1} parent=39 // pred_check_branch
          %1488 = sbr.rel (%p1486) target = $region52
        $region51: #{tpu_custom_call.1} parent=39 // pred_region
          %1490 = vsyncadd %s1482, 0
          %s1491 = smul.addr %s23, 8
          %s1492 = smul.addr %s1491, 8
          %s1493 = scalar_lea.hbm %s5, %s1492
          %s1495 = sshll.u32 %s1485, 4
          %s1496 = int_to_ptr.vmem [resolvable:$true] %s1495
          %s1497 = sshll.u32 %s1493, 4
          %s1498 = int_to_ptr.hbm [resolvable:$true] %s1497
          %1500 = dma.vmem_to_hbm [thread:$0]  %s1496, 1024, %s1498, %s1482
        $region52: #{tpu_custom_call.1} parent=39 // pred_fallthru
          _
      $region40: #{tpu_custom_call.1} parent=5 // pred_fallthru
        _
      %p1501 = scmp.le.s32.totalorder 2, %s18
      // Predicated region
      $region53: #{tpu_custom_call.1} parent=5 // pred_check
        %p1502 = pneg %p1501
      $region54: #{tpu_custom_call.1} parent=5 // pred_check_branch
        %1504 = sbr.rel (%p1502) target = $region56
      $region55: #{tpu_custom_call.1} parent=5 // pred_region
        %s1505 = ssub.s32 %s18, 2
        // Predicated region
        $region57: #{tpu_custom_call.1} parent=55 // pred_check
          %p1506 = pneg %p157
        $region58: #{tpu_custom_call.1} parent=55 // pred_check_branch
          %1508 = sbr.rel (%p1506) target = $region60
        $region59: #{tpu_custom_call.1} parent=55 // pred_region
          %s1509 = sand.u32 %s142, 1
          %s1510 = scalar_lea.sflag [#allocation4], %s1509
          %s1511 = sand.u32 %s142, 1
          %s1512 = smul.addr %s1511, 64
          %s1513 = scalar_lea.vmem [#allocation7], %s1512
          %1515 = dma.done %s1510, 1024
        $region60: #{tpu_custom_call.1} parent=55 // pred_fallthru
          _
      $region56: #{tpu_custom_call.1} parent=5 // pred_fallthru
        _
    $region6: #{tpu_custom_call.1} parent=1 // loop_footer
      %s22 = sadd.s32 1, %s18
    $region7: #{tpu_custom_call.1} parent=1 // loop_footer_branch
      %17 = sbr.rel target = $region3
    $region8: #{tpu_custom_call.1} parent=1 // loop_exit
      _
    %1516 = vsyncpa [#allocation3], 1
    %s1517 = scalar_lea.sflag [#allocation3], 1
    %1518 = vsyncpa %s1517, 1
    %1519 = vsyncpa [#allocation6], 1
    %1520 = vsyncpa [#allocation4], 1
    %s1521 = scalar_lea.sflag [#allocation4], 1
    %1522 = vsyncpa %s1521, 1

</llo_original>
